<compile_context>
chip_gen: v6e
topology: v6e:2x2x1
jax: 0.10.0
libtpu: 0.0.40
codegen_flags: <defaults>
</compile_context>

<pallas_src>
import functools

import jax
import jax.numpy as jnp
from jax.experimental import pallas as pl
from jax.experimental.pallas import tpu as pltpu


def _neumf_kernel(n_fc, ue_ref, ie_ref, w1u_ref, w1i_ref, b1_ref, *rest):
    """Operand order (all VMEM unless noted):
         ue_ref, ie_ref          (d_all, tb) bf16   lane-dense activation tiles
         w1u_ref, w1i_ref        (L1, d_all) bf16   first FC weight, split + zero-padded
         b1_ref                  (L1, 1)     f32
         [w_k, b_k]*(n_fc-1)     (out, in) bf16 / (out, 1) f32
         w_aff_h                 (1, L)      f32
         w_aff_mf                (1, d_all)  f32    zero on the MLP rows
         b_aff                   (1, 1)      f32    SMEM scalar
         out_ref                 (1, tb)     f32    lane-dense sigmoid output
    """
    n_rest = n_fc - 1
    fc_refs = rest[:2 * n_rest]
    w_aff_h = rest[2 * n_rest]
    w_aff_mf = rest[2 * n_rest + 1]
    b_aff = rest[2 * n_rest + 2]
    out_ref = rest[2 * n_rest + 3]

    ue = ue_ref[...]            # (d_all, tb) bf16 -- fed straight to the MXU
    ie = ie_ref[...]

    # GMF branch in f32 on the VPU, lane-dense over the batch.  The MLP rows of
    # the product are killed by the exact-zero columns of w_aff_mf below, so no
    # in-kernel slicing is needed.
    mf = ue.astype(jnp.float32) * ie.astype(jnp.float32)      # (d_all, tb) f32

    # First MLP layer without a concat:
    #   concat([ue_mlp, ie_mlp]) @ W1  ==  W1u_aug @ ue_all + W1i_aug @ ie_all
    # (augmented weights have zero columns over the MF rows).
    h = jnp.dot(w1u_ref[...], ue, preferred_element_type=jnp.float32)
    h = h + jnp.dot(w1i_ref[...], ie, preferred_element_type=jnp.float32)
    h = jnp.maximum(h + b1_ref[...], 0.0)                     # (L1, tb) f32

    for k in range(n_rest):
        w = fc_refs[2 * k]
        b = fc_refs[2 * k + 1]
        h = jnp.dot(w[...], h.astype(jnp.bfloat16),
                    preferred_element_type=jnp.float32)
        h = jnp.maximum(h + b[...], 0.0)                      # (out_k, tb) f32

    # Final affine without a concat; batch is the lane (N) dimension so the
    # (1, tb) result is lane-dense.  K is tiny, so f32 dots are fine here.
    logits = jnp.dot(w_aff_h[...], h, preferred_element_type=jnp.float32)
    logits = logits + jnp.dot(w_aff_mf[...], mf,
                              preferred_element_type=jnp.float32)
    logits = logits + b_aff[0, 0]
    out_ref[...] = jax.nn.sigmoid(logits)


def neumf_forward(params, user_indices, item_indices, *, tb=512):
    """Full NeuMF forward.  Embedding gather (memory glue) stays in XLA (2
    gathers on the column-concatenated tables); everything else is fused in one
    Pallas kernel tiled over the batch."""
    assert tb % 128 == 0, "tb must be a multiple of 128 (lane-dense layout)"

    fc_w, fc_b = params["fc_w"], params["fc_b"]          # (out,in) bf16 / (out,1) f32
    n_fc = len(fc_w)
    L1 = fc_w[0].shape[0]
    d_mlp = fc_w[0].shape[1] // 2
    L = fc_w[-1].shape[0]                                # layers[-1]
    aff_w = params["aff_w"]                              # (L + d_mf, 1) f32
    d_mf = aff_w.shape[0] - L
    d_all = d_mlp + d_mf
    assert params["user_table"].shape[1] == d_all

    # --- glue: 2 embedding gathers (mlp|mf columns concatenated), flipped to a
    # lane-dense (features, batch) layout for the kernel. ---
    ue_all = params["user_table"][user_indices].T        # (d_all, B) bf16
    ie_all = params["item_table"][item_indices].T        # (d_all, B) bf16

    B = user_indices.shape[0]
    B_pad = -(-B // tb) * tb
    if B_pad != B:
        pad = ((0, 0), (0, B_pad - B))
        ue_all = jnp.pad(ue_all, pad)
        ie_all = jnp.pad(ie_all, pad)

    # One-time weight plumbing (tiny): split the first FC weight into user/item
    # halves, zero-padded over the MF rows; split the final affine into the MLP
    # half and a zero-padded GMF half.  Removes every in-kernel concat/slice.
    zeros_mf = jnp.zeros((L1, d_mf), jnp.bfloat16)
    w1u = jnp.concatenate([fc_w[0][:, :d_mlp], zeros_mf], axis=1)   # (L1, d_all) bf16
    w1i = jnp.concatenate([fc_w[0][:, d_mlp:], zeros_mf], axis=1)   # (L1, d_all) bf16
    w_aff_h = aff_w[:L].T                                           # (1, L) f32
    w_aff_mf = jnp.concatenate(
        [jnp.zeros((1, d_mlp), jnp.float32), aff_w[L:].T], axis=1)  # (1, d_all) f32
    b_aff = params["aff_b"]                                         # (1, 1) f32

    def batch_spec(d):
        return pl.BlockSpec((d, tb), lambda i: (0, i))

    def full_spec(a):
        return pl.BlockSpec(a.shape, lambda i: (0, 0))

    in_arrays = [ue_all, ie_all, w1u, w1i, fc_b[0]]
    in_specs = [batch_spec(d_all), batch_spec(d_all),
                full_spec(w1u), full_spec(w1i), full_spec(fc_b[0])]
    for w, b in zip(fc_w[1:], fc_b[1:]):
        in_arrays += [w, b]
        in_specs += [full_spec(w), full_spec(b)]
    in_arrays += [w_aff_h, w_aff_mf, b_aff]
    in_specs += [full_spec(w_aff_h), full_spec(w_aff_mf),
                 pl.BlockSpec(memory_space=pltpu.MemorySpace.SMEM)]

    # Advisory cost estimate so XLA schedules the surrounding gathers sensibly.
    mm_flops = 2 * L1 * 2 * d_all
    mm_flops += sum(2 * int(w.shape[0]) * int(w.shape[1]) for w in fc_w[1:])
    mm_flops += 2 * (L + d_all)
    fl_per_row = mm_flops + d_all
    weight_bytes = 2 * (int(w1u.size) + int(w1i.size)
                        + sum(int(w.size) for w in fc_w[1:])) \
        + 4 * (sum(int(b.size) for b in fc_b) + int(aff_w.size) + 1)
    cost = pl.CostEstimate(
        flops=int(B_pad * fl_per_row),
        transcendentals=int(B_pad),
        bytes_accessed=int(2 * 2 * B_pad * d_all      # bf16 activation streams
                           + 4 * B_pad                # f32 output
                           + weight_bytes))

    out = pl.pallas_call(
        functools.partial(_neumf_kernel, n_fc),
        out_shape=jax.ShapeDtypeStruct((1, B_pad), jnp.float32),
        grid=(B_pad // tb,),
        in_specs=in_specs,
        out_specs=pl.BlockSpec((1, tb), lambda i: (0, i)),
        compiler_params=pltpu.CompilerParams(
            dimension_semantics=("parallel",)),
        cost_estimate=cost,
    )(*in_arrays)

    return out.reshape(B_pad)[:B]   # matches rating.squeeze()


def init_neumf_params(key, num_users, num_items, factor_num, layers):
    """Matches the PyTorch init_weight(): embeddings ~ N(0, 0.01), Linear
    weights xavier_uniform (stored torch-style (out, in), bf16 for the MXU fast
    path), biases zero.  MLP/MF embedding tables are concatenated column-wise
    so the forward pass issues 2 gathers instead of 4."""
    assert layers[0] % 2 == 0
    d_mlp = layers[0] // 2
    keys = jax.random.split(key, 4 + len(layers))

    def xavier(k, out_f, in_f, dtype):
        limit = jnp.sqrt(6.0 / (in_f + out_f))
        return jax.random.uniform(k, (out_f, in_f), jnp.float32,
                                  minval=-limit, maxval=limit).astype(dtype)

    def emb(k, n, d):
        return (0.01 * jax.random.normal(k, (n, d), jnp.float32)).astype(jnp.bfloat16)

    user_mlp = emb(keys[0], num_users, d_mlp)
    item_mlp = emb(keys[1], num_items, d_mlp)
    user_mf = emb(keys[2], num_users, factor_num)
    item_mf = emb(keys[3], num_items, factor_num)

    params = {
        "user_table": jnp.concatenate([user_mlp, user_mf], axis=1),  # (U, d_mlp+d_mf) bf16
        "item_table": jnp.concatenate([item_mlp, item_mf], axis=1),  # (I, d_mlp+d_mf) bf16
        "fc_w": [],
        "fc_b": [],
    }
    for idx, (in_size, out_size) in enumerate(zip(layers[:-1], layers[1:])):
        params["fc_w"].append(xavier(keys[4 + idx], out_size, in_size, jnp.bfloat16))
        params["fc_b"].append(jnp.zeros((out_size, 1), jnp.float32))
    aff_in = layers[-1] + factor_num
    params["aff_w"] = xavier(keys[4 + len(layers) - 1], 1, aff_in, jnp.float32).T  # (aff_in, 1)
    params["aff_b"] = jnp.zeros((1, 1), jnp.float32)
    return params


def neumf_reference(params, user_indices, item_indices):
    """Pure-JAX reference with the same precision policy (bf16 dot inputs, f32
    accumulation / elementwise) for the correctness check."""
    fc_w, fc_b = params["fc_w"], params["fc_b"]
    d_mlp = fc_w[0].shape[1] // 2
    ue = params["user_table"][user_indices]      # (B, d_all) bf16
    ie = params["item_table"][item_indices]
    h = jnp.concatenate([ue[:, :d_mlp], ie[:, :d_mlp]], axis=-1)
    mf = ue[:, d_mlp:].astype(jnp.float32) * ie[:, d_mlp:].astype(jnp.float32)
    for w, b in zip(fc_w, fc_b):
        h = jnp.dot(h.astype(jnp.bfloat16), w.T,
                    preferred_element_type=jnp.float32)
        h = jnp.maximum(h + b[:, 0], 0.0)
    vec = jnp.concatenate([h, mf], axis=-1)
    logits = vec @ params["aff_w"] + params["aff_b"]
    return jax.nn.sigmoid(logits)[:, 0]


if __name__ == "__main__":
    # Small config consistent with the module (args.layers=[64,32,16,8], factor_num=8).
    num_users, num_items = 32, 64
    factor_num = 8
    layers = [64, 32, 16, 8]
    B = 1024                      # 2 batch tiles of 512 -> grid of 2 (both v7x TCs busy)

    key = jax.random.PRNGKey(0)
    pkey, ukey, ikey = jax.random.split(key, 3)
    params = init_neumf_params(pkey, num_users, num_items, factor_num, layers)

    user_indices = jax.random.randint(ukey, (B,), 0, num_users, dtype=jnp.int32)
    item_indices = jax.random.randint(ikey, (B,), 0, num_items, dtype=jnp.int32)

    rating = neumf_forward(params, user_indices, item_indices, tb=512)
    rating = jax.block_until_ready(rating)

    ref = neumf_reference(params, user_indices, item_indices)
    assert rating.shape == (B,)
    assert jnp.allclose(rating, ref, atol=2e-3, rtol=2e-3), "mismatch vs reference"

    print("KERNEL_OK")
</pallas_src>

<mosaic_0001>
module attributes {stable_mosaic.version = 11 : i64} {
  func.func @_neumf_kernel(%arg0: i32, %arg1: memref<40x512xbf16, #tpu.memory_space<vmem>>, %arg2: memref<40x512xbf16, #tpu.memory_space<vmem>>, %arg3: memref<32x40xbf16, #tpu.memory_space<vmem>>, %arg4: memref<32x40xbf16, #tpu.memory_space<vmem>>, %arg5: memref<32x1xf32, #tpu.memory_space<vmem>>, %arg6: memref<16x32xbf16, #tpu.memory_space<vmem>>, %arg7: memref<16x1xf32, #tpu.memory_space<vmem>>, %arg8: memref<8x16xbf16, #tpu.memory_space<vmem>>, %arg9: memref<8x1xf32, #tpu.memory_space<vmem>>, %arg10: memref<1x8xf32, #tpu.memory_space<vmem>>, %arg11: memref<1x40xf32, #tpu.memory_space<vmem>>, %arg12: memref<1x1xf32, #tpu.memory_space<smem>>, %arg13: memref<1x512xf32, #tpu.memory_space<vmem>>) attributes {dimension_semantics = [#tpu.dimension_semantics<parallel>], iteration_bounds = array<i64: 2>, scalar_prefetch = 0 : i64, scratch_operands = 0 : i64, tpu.core_type = #tpu.core_type<tc>, window_params = [{transform_indices = @transform_0, window_bounds = array<i64: 40, 512>}, {transform_indices = @transform_1, window_bounds = array<i64: 40, 512>}, {pipeline_mode = #tpu.pipeline_mode<synchronous>, transform_indices = @transform_2, window_bounds = array<i64: 32, 40>}, {pipeline_mode = #tpu.pipeline_mode<synchronous>, transform_indices = @transform_3, window_bounds = array<i64: 32, 40>}, {pipeline_mode = #tpu.pipeline_mode<synchronous>, transform_indices = @transform_4, window_bounds = array<i64: 32, 1>}, {pipeline_mode = #tpu.pipeline_mode<synchronous>, transform_indices = @transform_5, window_bounds = array<i64: 16, 32>}, {pipeline_mode = #tpu.pipeline_mode<synchronous>, transform_indices = @transform_6, window_bounds = array<i64: 16, 1>}, {pipeline_mode = #tpu.pipeline_mode<synchronous>, transform_indices = @transform_7, window_bounds = array<i64: 8, 16>}, {pipeline_mode = #tpu.pipeline_mode<synchronous>, transform_indices = @transform_8, window_bounds = array<i64: 8, 1>}, {pipeline_mode = #tpu.pipeline_mode<synchronous>, transform_indices = @transform_9, window_bounds = array<i64: 1, 8>}, {pipeline_mode = #tpu.pipeline_mode<synchronous>, transform_indices = @transform_10, window_bounds = array<i64: 1, 40>}, {transform_indices = @transform_11, window_bounds = array<i64: 1, 1>}, {transform_indices = @transform_12, window_bounds = array<i64: 1, 512>}]} {
    %c0 = arith.constant 0 : index
    %c0_0 = arith.constant 0 : index
    %0 = vector.load %arg1[%c0, %c0_0] : memref<40x512xbf16, #tpu.memory_space<vmem>>, vector<40x512xbf16>
    %c0_1 = arith.constant 0 : index
    %c0_2 = arith.constant 0 : index
    %1 = vector.load %arg2[%c0_1, %c0_2] : memref<40x512xbf16, #tpu.memory_space<vmem>>, vector<40x512xbf16>
    %2 = arith.extf %0 : vector<40x512xbf16> to vector<40x512xf32>
    %3 = arith.extf %1 : vector<40x512xbf16> to vector<40x512xf32>
    %4 = arith.mulf %2, %3 : vector<40x512xf32>
    %c0_3 = arith.constant 0 : index
    %c0_4 = arith.constant 0 : index
    %5 = vector.load %arg3[%c0_3, %c0_4] : memref<32x40xbf16, #tpu.memory_space<vmem>>, vector<32x40xbf16>
    %cst = arith.constant dense<0.000000e+00> : vector<32x512xf32>
    %6 = tpu.matmul %5, %0, %cst {dimension_numbers = #tpu.dot_dimension_numbers<[1], [0], [0], [1], [0, 0, 1, 1], [], []>} : vector<32x40xbf16>, vector<40x512xbf16>, vector<32x512xf32> -> vector<32x512xf32>
    %c0_5 = arith.constant 0 : index
    %c0_6 = arith.constant 0 : index
    %7 = vector.load %arg4[%c0_5, %c0_6] : memref<32x40xbf16, #tpu.memory_space<vmem>>, vector<32x40xbf16>
    %cst_7 = arith.constant dense<0.000000e+00> : vector<32x512xf32>
    %8 = tpu.matmul %7, %1, %cst_7 {dimension_numbers = #tpu.dot_dimension_numbers<[1], [0], [0], [1], [0, 0, 1, 1], [], []>} : vector<32x40xbf16>, vector<40x512xbf16>, vector<32x512xf32> -> vector<32x512xf32>
    %9 = arith.addf %6, %8 : vector<32x512xf32>
    %c0_8 = arith.constant 0 : index
    %c0_9 = arith.constant 0 : index
    %10 = vector.load %arg5[%c0_8, %c0_9] : memref<32x1xf32, #tpu.memory_space<vmem>>, vector<32x1xf32>
    %11 = vector.broadcast %10 : vector<32x1xf32> to vector<32x512xf32>
    %12 = arith.addf %9, %11 : vector<32x512xf32>
    %cst_10 = arith.constant 0.000000e+00 : f32
    %13 = vector.broadcast %cst_10 : f32 to vector<32x512xf32>
    %14 = arith.maximumf %12, %13 : vector<32x512xf32>
    %c0_11 = arith.constant 0 : index
    %c0_12 = arith.constant 0 : index
    %15 = vector.load %arg6[%c0_11, %c0_12] : memref<16x32xbf16, #tpu.memory_space<vmem>>, vector<16x32xbf16>
    %16 = arith.truncf %14 : vector<32x512xf32> to vector<32x512xbf16>
    %cst_13 = arith.constant dense<0.000000e+00> : vector<16x512xf32>
    %17 = tpu.matmul %15, %16, %cst_13 {dimension_numbers = #tpu.dot_dimension_numbers<[1], [0], [0], [1], [0, 0, 1, 1], [], []>} : vector<16x32xbf16>, vector<32x512xbf16>, vector<16x512xf32> -> vector<16x512xf32>
    %c0_14 = arith.constant 0 : index
    %c0_15 = arith.constant 0 : index
    %18 = vector.load %arg7[%c0_14, %c0_15] : memref<16x1xf32, #tpu.memory_space<vmem>>, vector<16x1xf32>
    %19 = vector.broadcast %18 : vector<16x1xf32> to vector<16x512xf32>
    %20 = arith.addf %17, %19 : vector<16x512xf32>
    %cst_16 = arith.constant 0.000000e+00 : f32
    %21 = vector.broadcast %cst_16 : f32 to vector<16x512xf32>
    %22 = arith.maximumf %20, %21 : vector<16x512xf32>
    %c0_17 = arith.constant 0 : index
    %c0_18 = arith.constant 0 : index
    %23 = vector.load %arg8[%c0_17, %c0_18] : memref<8x16xbf16, #tpu.memory_space<vmem>>, vector<8x16xbf16>
    %24 = arith.truncf %22 : vector<16x512xf32> to vector<16x512xbf16>
    %cst_19 = arith.constant dense<0.000000e+00> : vector<8x512xf32>
    %25 = tpu.matmul %23, %24, %cst_19 {dimension_numbers = #tpu.dot_dimension_numbers<[1], [0], [0], [1], [0, 0, 1, 1], [], []>} : vector<8x16xbf16>, vector<16x512xbf16>, vector<8x512xf32> -> vector<8x512xf32>
    %c0_20 = arith.constant 0 : index
    %c0_21 = arith.constant 0 : index
    %26 = vector.load %arg9[%c0_20, %c0_21] : memref<8x1xf32, #tpu.memory_space<vmem>>, vector<8x1xf32>
    %27 = vector.broadcast %26 : vector<8x1xf32> to vector<8x512xf32>
    %28 = arith.addf %25, %27 : vector<8x512xf32>
    %cst_22 = arith.constant 0.000000e+00 : f32
    %29 = vector.broadcast %cst_22 : f32 to vector<8x512xf32>
    %30 = arith.maximumf %28, %29 : vector<8x512xf32>
    %c0_23 = arith.constant 0 : index
    %c0_24 = arith.constant 0 : index
    %31 = vector.load %arg10[%c0_23, %c0_24] : memref<1x8xf32, #tpu.memory_space<vmem>>, vector<1x8xf32>
    %cst_25 = arith.constant dense<0.000000e+00> : vector<1x512xf32>
    %32 = tpu.matmul %31, %30, %cst_25 {dimension_numbers = #tpu.dot_dimension_numbers<[1], [0], [0], [1], [0, 0, 1, 1], [], []>} : vector<1x8xf32>, vector<8x512xf32>, vector<1x512xf32> -> vector<1x512xf32>
    %c0_26 = arith.constant 0 : index
    %c0_27 = arith.constant 0 : index
    %33 = vector.load %arg11[%c0_26, %c0_27] : memref<1x40xf32, #tpu.memory_space<vmem>>, vector<1x40xf32>
    %cst_28 = arith.constant dense<0.000000e+00> : vector<1x512xf32>
    %34 = tpu.matmul %33, %4, %cst_28 {dimension_numbers = #tpu.dot_dimension_numbers<[1], [0], [0], [1], [0, 0, 1, 1], [], []>} : vector<1x40xf32>, vector<40x512xf32>, vector<1x512xf32> -> vector<1x512xf32>
    %35 = arith.addf %32, %34 : vector<1x512xf32>
    %c0_29 = arith.constant 0 : index
    %c0_30 = arith.constant 0 : index
    %36 = memref.load %arg12[%c0_29, %c0_30] : memref<1x1xf32, #tpu.memory_space<smem>>
    %37 = vector.broadcast %36 : f32 to vector<1x512xf32>
    %38 = arith.addf %35, %37 : vector<1x512xf32>
    %39 = arith.negf %38 : vector<1x512xf32>
    %40 = math.exp %39 : vector<1x512xf32>
    %cst_31 = arith.constant 1.000000e+00 : f32
    %41 = vector.broadcast %cst_31 : f32 to vector<1x512xf32>
    %42 = arith.addf %41, %40 : vector<1x512xf32>
    %43 = arith.divf %41, %42 : vector<1x512xf32>
    %c0_32 = arith.constant 0 : index
    %c0_33 = arith.constant 0 : index
    %44 = vector.load %arg13[%c0_32, %c0_33] : memref<1x512xf32, #tpu.memory_space<vmem>>, vector<1x512xf32>
    tpu.vector_store %arg13[%c0_32, %c0_33], %43 {strides = array<i32>} : memref<1x512xf32, #tpu.memory_space<vmem>>, vector<1x512xf32>,
    return
  }
  func.func @transform_0(%arg0: i32) -> (i32, i32) {
    %c0_i32 = arith.constant 0 : i32
    %c0_i32_0 = arith.constant 0 : i32
    return %c0_i32, %arg0 : i32, i32
  }
  func.func @transform_1(%arg0: i32) -> (i32, i32) {
    %c0_i32 = arith.constant 0 : i32
    %c0_i32_0 = arith.constant 0 : i32
    return %c0_i32, %arg0 : i32, i32
  }
  func.func @transform_2(%arg0: i32) -> (i32, i32) {
    %c0_i32 = arith.constant 0 : i32
    %c0_i32_0 = arith.constant 0 : i32
    %c0_i32_1 = arith.constant 0 : i32
    return %c0_i32, %c0_i32_0 : i32, i32
  }
  func.func @transform_3(%arg0: i32) -> (i32, i32) {
    %c0_i32 = arith.constant 0 : i32
    %c0_i32_0 = arith.constant 0 : i32
    %c0_i32_1 = arith.constant 0 : i32
    return %c0_i32, %c0_i32_0 : i32, i32
  }
  func.func @transform_4(%arg0: i32) -> (i32, i32) {
    %c0_i32 = arith.constant 0 : i32
    %c0_i32_0 = arith.constant 0 : i32
    %c0_i32_1 = arith.constant 0 : i32
    return %c0_i32, %c0_i32_0 : i32, i32
  }
  func.func @transform_5(%arg0: i32) -> (i32, i32) {
    %c0_i32 = arith.constant 0 : i32
    %c0_i32_0 = arith.constant 0 : i32
    %c0_i32_1 = arith.constant 0 : i32
    return %c0_i32, %c0_i32_0 : i32, i32
  }
  func.func @transform_6(%arg0: i32) -> (i32, i32) {
    %c0_i32 = arith.constant 0 : i32
    %c0_i32_0 = arith.constant 0 : i32
    %c0_i32_1 = arith.constant 0 : i32
    return %c0_i32, %c0_i32_0 : i32, i32
  }
  func.func @transform_7(%arg0: i32) -> (i32, i32) {
    %c0_i32 = arith.constant 0 : i32
    %c0_i32_0 = arith.constant 0 : i32
    %c0_i32_1 = arith.constant 0 : i32
    return %c0_i32, %c0_i32_0 : i32, i32
  }
  func.func @transform_8(%arg0: i32) -> (i32, i32) {
    %c0_i32 = arith.constant 0 : i32
    %c0_i32_0 = arith.constant 0 : i32
    %c0_i32_1 = arith.constant 0 : i32
    return %c0_i32, %c0_i32_0 : i32, i32
  }
  func.func @transform_9(%arg0: i32) -> (i32, i32) {
    %c0_i32 = arith.constant 0 : i32
    %c0_i32_0 = arith.constant 0 : i32
    %c0_i32_1 = arith.constant 0 : i32
    return %c0_i32, %c0_i32_0 : i32, i32
  }
  func.func @transform_10(%arg0: i32) -> (i32, i32) {
    %c0_i32 = arith.constant 0 : i32
    %c0_i32_0 = arith.constant 0 : i32
    %c0_i32_1 = arith.constant 0 : i32
    return %c0_i32, %c0_i32_0 : i32, i32
  }
  func.func @transform_11(%arg0: i32) -> (i32, i32) {
    %c0_i32 = arith.constant 0 : i32
    %c0_i32_0 = arith.constant 0 : i32
    %c0_i32_1 = arith.constant 0 : i32
    return %c0_i32, %c0_i32_0 : i32, i32
  }
  func.func @transform_12(%arg0: i32) -> (i32, i32) {
    %c0_i32 = arith.constant 0 : i32
    %c0_i32_0 = arith.constant 0 : i32
    return %c0_i32, %arg0 : i32, i32
  }
}

</mosaic_0001>

<llo_original>
// kernel: tpu_custom_call.1
$region0: #{tpu_custom_call.1}
  #allocation0 [shape = 'u32[]', space=smem, size = 0x4, offset = 0x4, fixed_abs, tag = 'smem constant byte address 0x4 - core index']
  #allocation1 [shape = 'u32[144,128]{1,0:T(1,128)}', space=vmem, size = 0x12000, scoped, tag = 'internal scratch']
  #allocation2 [shape = 'f32[1,1]{1,0:T(1,128)S(6)}', space=smem, size = 0x200, scoped, tag = 'scoped memory for tpu_custom_call.1']
  %s0 = inlined_call_operand.hbm [shape: bf16[40,1024], index: 0, kind: input, shape index: {}]
  %s1 = inlined_call_operand.hbm [shape: bf16[40,1024], index: 1, kind: input, shape index: {}]
  %s2 = inlined_call_operand.vmem [shape: bf16[32,40], index: 2, kind: input, shape index: {}]
  %s3 = inlined_call_operand.vmem [shape: bf16[32,40], index: 3, kind: input, shape index: {}]
  %s4 = inlined_call_operand.vmem [shape: f32[32,1], index: 4, kind: input, shape index: {}]
  %s5 = inlined_call_operand.vmem [shape: bf16[16,32], index: 5, kind: input, shape index: {}]
  %s6 = inlined_call_operand.vmem [shape: f32[16,1], index: 6, kind: input, shape index: {}]
  %s7 = inlined_call_operand.vmem [shape: bf16[8,16], index: 7, kind: input, shape index: {}]
  %s8 = inlined_call_operand.vmem [shape: f32[8,1], index: 8, kind: input, shape index: {}]
  %s9 = inlined_call_operand.vmem [shape: f32[1,8], index: 9, kind: input, shape index: {}]
  %s10 = inlined_call_operand.vmem [shape: f32[1,40], index: 10, kind: input, shape index: {}]
  %s11 = inlined_call_operand.<no memory space> [shape: f32[1,1], index: 11, kind: input, shape index: {}]
  %s12 = inlined_call_operand.hbm [shape: f32[1,1024], index: 12, kind: output, shape index: {}]
  %s13 = sld [smem:[#allocation0]]
  $region89: #{tpu_custom_call.1} parent=0
    _
  %s15 = ssub.s32 1, %s13
  %s16 = scalar_select 0, %s15, %s13
  %17 = sst [smem:[#allocation2]] %s11
  $region1: #{tpu_custom_call.1} parent=0
    #allocation3 [shape = 'u8[81920]{0}', space=vmem, size = 0x14000, scoped, tag = 'input window, operand 0']
    #allocation4 [shape = 's32[2]{0}', space=sflag, size = 0x8, scoped, tag = 'scoped memory for tpu_custom_call.1']
    #allocation5 [shape = 's32[2]{0}', space=sflag, size = 0x8, scoped, tag = 'scoped memory for tpu_custom_call.1']
    #allocation6 [shape = 'u8[81920]{0}', space=vmem, size = 0x14000, scoped, tag = 'input window, operand 1']
    #allocation7 [shape = 's32[2]{0}', space=sflag, size = 0x8, scoped, tag = 'scoped memory for tpu_custom_call.1']
    #allocation8 [shape = 'u8[4096]{0}', space=vmem, size = 0x1000, scoped, tag = 'output window, operand 0']
    %18 = vsyncpa [#allocation4], 0
    %s19 = scalar_lea.sflag [#allocation4], 1
    %20 = vsyncpa %s19, 0
    %21 = vsyncpa [#allocation7], 0
    %s22 = scalar_lea.sflag [#allocation7], 1
    %23 = vsyncpa %s22, 0
    %24 = vsyncpa [#allocation5], 0
    %s25 = scalar_lea.sflag [#allocation5], 1
    %26 = vsyncpa %s25, 0
    loop: start=0, step=1, limit=4
    $region2: #{tpu_custom_call.1} parent=1 // loop_pre_header
      _
    $region3: #{tpu_custom_call.1} parent=1 // loop_header
      %s28 = sphi 0, %s32
      %p29 = scmp.ge.s32.totalorder %s28, 4
      %s38 = sphi 0, %s40
      %s41 = sphi 0, %s38
      %s42 = sphi 0, %s41
      %s58 = sphi 0, %s42
      %s64 = sphi 0, %s66
      %s67 = sphi 0, %s64
      %s68 = sphi 0, %s67
      %s84 = sphi 0, %s68
      %s88 = sphi 0, %s88
      %s90 = sphi 0, %s88
      %s91 = sphi 0, %s90
      %s105 = sphi 0, %s91
      %s109 = sphi 0, %s109
      %s111 = sphi 0, %s109
      %s112 = sphi 0, %s111
      %s126 = sphi 0, %s112
      %s130 = sphi 0, %s130
      %s132 = sphi 0, %s130
      %s133 = sphi 0, %s132
      %s147 = sphi 0, %s133
      %s151 = sphi 0, %s151
      %s153 = sphi 0, %s151
      %s154 = sphi 0, %s153
      %s168 = sphi 0, %s154
      %s172 = sphi 0, %s172
      %s174 = sphi 0, %s172
      %s175 = sphi 0, %s174
      %s189 = sphi 0, %s175
      %s193 = sphi 0, %s193
      %s195 = sphi 0, %s193
      %s196 = sphi 0, %s195
      %s210 = sphi 0, %s196
      %s214 = sphi 0, %s214
      %s216 = sphi 0, %s214
      %s217 = sphi 0, %s216
      %s231 = sphi 0, %s217
      %s235 = sphi 0, %s235
      %s237 = sphi 0, %s235
      %s238 = sphi 0, %s237
      %s252 = sphi 0, %s238
      %s256 = sphi 0, %s256
      %s258 = sphi 0, %s256
      %s259 = sphi 0, %s258
      %s273 = sphi 0, %s259
      %s277 = sphi 0, %s277
      %s279 = sphi 0, %s277
      %s280 = sphi 0, %s279
      %s294 = sphi 0, %s280
      %s300 = sphi 0, %s302
      %s303 = sphi 0, %s300
      %s304 = sphi 0, %s303
      %s320 = sphi 0, %s304
    $region4: #{tpu_custom_call.1} parent=1 // loop_header_branch
      %31 = sbr.rel (%p29) target = $region8
    $region5: #{tpu_custom_call.1} parent=1 // loop_body
      %s33 = ssub.s32 %s28, 1
      %s34 = ssub.s32 %s28, 2
      %s35 = sadd.s32 %s28, 1
      %s36 = ssub.s32 %s28, %s35
      %p37 = scmp.eq.s32.totalorder %s36, 0
      %s39 = sadd.s32 %s38, 1
      %s40 = scalar_select %p37, %s38, %s39
      %p43 = pneg %p37
      %p44 = scmp.eq.s32.totalorder %s28, 1
      %p45 = por %p43, %p44
      %p46 = scmp.ne.s32.totalorder %s38, %s41
      %p47 = scmp.eq.s32.totalorder %s28, 0
      %p48 = por %p46, %p47
      %p49 = scmp.ne.s32.totalorder %s38, %s41
      %p50 = scmp.eq.s32.totalorder %s33, 1
      %p51 = por %p49, %p50
      %p52 = scmp.ne.s32.totalorder %s41, %s42
      %p53 = scmp.eq.s32.totalorder %s33, 0
      %p54 = por %p52, %p53
      %p55 = scmp.ne.s32.totalorder %s41, %s42
      %p56 = scmp.eq.s32.totalorder %s34, 1
      %p57 = por %p55, %p56
      %p59 = scmp.ne.s32.totalorder %s42, %s58
      %p60 = scmp.eq.s32.totalorder %s34, 0
      %p61 = por %p59, %p60
      %s62 = ssub.s32 %s28, %s35
      %p63 = scmp.eq.s32.totalorder %s62, 0
      %s65 = sadd.s32 %s64, 1
      %s66 = scalar_select %p63, %s64, %s65
      %p69 = pneg %p63
      %p70 = scmp.eq.s32.totalorder %s28, 1
      %p71 = por %p69, %p70
      %p72 = scmp.ne.s32.totalorder %s64, %s67
      %p73 = scmp.eq.s32.totalorder %s28, 0
      %p74 = por %p72, %p73
      %p75 = scmp.ne.s32.totalorder %s64, %s67
      %p76 = scmp.eq.s32.totalorder %s33, 1
      %p77 = por %p75, %p76
      %p78 = scmp.ne.s32.totalorder %s67, %s68
      %p79 = scmp.eq.s32.totalorder %s33, 0
      %p80 = por %p78, %p79
      %p81 = scmp.ne.s32.totalorder %s67, %s68
      %p82 = scmp.eq.s32.totalorder %s34, 1
      %p83 = por %p81, %p82
      %p85 = scmp.ne.s32.totalorder %s68, %s84
      %p86 = scmp.eq.s32.totalorder %s34, 0
      %p87 = por %p85, %p86
      %s89 = sadd.s32 %s88, 1
      %p92 = scmp.eq.s32.totalorder %s28, 1
      %p93 = scmp.ne.s32.totalorder %s88, %s90
      %p94 = scmp.eq.s32.totalorder %s28, 0
      %p95 = por %p93, %p94
      %p96 = scmp.ne.s32.totalorder %s88, %s90
      %p97 = scmp.eq.s32.totalorder %s33, 1
      %p98 = por %p96, %p97
      %p99 = scmp.ne.s32.totalorder %s90, %s91
      %p100 = scmp.eq.s32.totalorder %s33, 0
      %p101 = por %p99, %p100
      %p102 = scmp.ne.s32.totalorder %s90, %s91
      %p103 = scmp.eq.s32.totalorder %s34, 1
      %p104 = por %p102, %p103
      %p106 = scmp.ne.s32.totalorder %s91, %s105
      %p107 = scmp.eq.s32.totalorder %s34, 0
      %p108 = por %p106, %p107
      %s110 = sadd.s32 %s109, 1
      %p113 = scmp.eq.s32.totalorder %s28, 1
      %p114 = scmp.ne.s32.totalorder %s109, %s111
      %p115 = scmp.eq.s32.totalorder %s28, 0
      %p116 = por %p114, %p115
      %p117 = scmp.ne.s32.totalorder %s109, %s111
      %p118 = scmp.eq.s32.totalorder %s33, 1
      %p119 = por %p117, %p118
      %p120 = scmp.ne.s32.totalorder %s111, %s112
      %p121 = scmp.eq.s32.totalorder %s33, 0
      %p122 = por %p120, %p121
      %p123 = scmp.ne.s32.totalorder %s111, %s112
      %p124 = scmp.eq.s32.totalorder %s34, 1
      %p125 = por %p123, %p124
      %p127 = scmp.ne.s32.totalorder %s112, %s126
      %p128 = scmp.eq.s32.totalorder %s34, 0
      %p129 = por %p127, %p128
      %s131 = sadd.s32 %s130, 1
      %p134 = scmp.eq.s32.totalorder %s28, 1
      %p135 = scmp.ne.s32.totalorder %s130, %s132
      %p136 = scmp.eq.s32.totalorder %s28, 0
      %p137 = por %p135, %p136
      %p138 = scmp.ne.s32.totalorder %s130, %s132
      %p139 = scmp.eq.s32.totalorder %s33, 1
      %p140 = por %p138, %p139
      %p141 = scmp.ne.s32.totalorder %s132, %s133
      %p142 = scmp.eq.s32.totalorder %s33, 0
      %p143 = por %p141, %p142
      %p144 = scmp.ne.s32.totalorder %s132, %s133
      %p145 = scmp.eq.s32.totalorder %s34, 1
      %p146 = por %p144, %p145
      %p148 = scmp.ne.s32.totalorder %s133, %s147
      %p149 = scmp.eq.s32.totalorder %s34, 0
      %p150 = por %p148, %p149
      %s152 = sadd.s32 %s151, 1
      %p155 = scmp.eq.s32.totalorder %s28, 1
      %p156 = scmp.ne.s32.totalorder %s151, %s153
      %p157 = scmp.eq.s32.totalorder %s28, 0
      %p158 = por %p156, %p157
      %p159 = scmp.ne.s32.totalorder %s151, %s153
      %p160 = scmp.eq.s32.totalorder %s33, 1
      %p161 = por %p159, %p160
      %p162 = scmp.ne.s32.totalorder %s153, %s154
      %p163 = scmp.eq.s32.totalorder %s33, 0
      %p164 = por %p162, %p163
      %p165 = scmp.ne.s32.totalorder %s153, %s154
      %p166 = scmp.eq.s32.totalorder %s34, 1
      %p167 = por %p165, %p166
      %p169 = scmp.ne.s32.totalorder %s154, %s168
      %p170 = scmp.eq.s32.totalorder %s34, 0
      %p171 = por %p169, %p170
      %s173 = sadd.s32 %s172, 1
      %p176 = scmp.eq.s32.totalorder %s28, 1
      %p177 = scmp.ne.s32.totalorder %s172, %s174
      %p178 = scmp.eq.s32.totalorder %s28, 0
      %p179 = por %p177, %p178
      %p180 = scmp.ne.s32.totalorder %s172, %s174
      %p181 = scmp.eq.s32.totalorder %s33, 1
      %p182 = por %p180, %p181
      %p183 = scmp.ne.s32.totalorder %s174, %s175
      %p184 = scmp.eq.s32.totalorder %s33, 0
      %p185 = por %p183, %p184
      %p186 = scmp.ne.s32.totalorder %s174, %s175
      %p187 = scmp.eq.s32.totalorder %s34, 1
      %p188 = por %p186, %p187
      %p190 = scmp.ne.s32.totalorder %s175, %s189
      %p191 = scmp.eq.s32.totalorder %s34, 0
      %p192 = por %p190, %p191
      %s194 = sadd.s32 %s193, 1
      %p197 = scmp.eq.s32.totalorder %s28, 1
      %p198 = scmp.ne.s32.totalorder %s193, %s195
      %p199 = scmp.eq.s32.totalorder %s28, 0
      %p200 = por %p198, %p199
      %p201 = scmp.ne.s32.totalorder %s193, %s195
      %p202 = scmp.eq.s32.totalorder %s33, 1
      %p203 = por %p201, %p202
      %p204 = scmp.ne.s32.totalorder %s195, %s196
      %p205 = scmp.eq.s32.totalorder %s33, 0
      %p206 = por %p204, %p205
      %p207 = scmp.ne.s32.totalorder %s195, %s196
      %p208 = scmp.eq.s32.totalorder %s34, 1
      %p209 = por %p207, %p208
      %p211 = scmp.ne.s32.totalorder %s196, %s210
      %p212 = scmp.eq.s32.totalorder %s34, 0
      %p213 = por %p211, %p212
      %s215 = sadd.s32 %s214, 1
      %p218 = scmp.eq.s32.totalorder %s28, 1
      %p219 = scmp.ne.s32.totalorder %s214, %s216
      %p220 = scmp.eq.s32.totalorder %s28, 0
      %p221 = por %p219, %p220
      %p222 = scmp.ne.s32.totalorder %s214, %s216
      %p223 = scmp.eq.s32.totalorder %s33, 1
      %p224 = por %p222, %p223
      %p225 = scmp.ne.s32.totalorder %s216, %s217
      %p226 = scmp.eq.s32.totalorder %s33, 0
      %p227 = por %p225, %p226
      %p228 = scmp.ne.s32.totalorder %s216, %s217
      %p229 = scmp.eq.s32.totalorder %s34, 1
      %p230 = por %p228, %p229
      %p232 = scmp.ne.s32.totalorder %s217, %s231
      %p233 = scmp.eq.s32.totalorder %s34, 0
      %p234 = por %p232, %p233
      %s236 = sadd.s32 %s235, 1
      %p239 = scmp.eq.s32.totalorder %s28, 1
      %p240 = scmp.ne.s32.totalorder %s235, %s237
      %p241 = scmp.eq.s32.totalorder %s28, 0
      %p242 = por %p240, %p241
      %p243 = scmp.ne.s32.totalorder %s235, %s237
      %p244 = scmp.eq.s32.totalorder %s33, 1
      %p245 = por %p243, %p244
      %p246 = scmp.ne.s32.totalorder %s237, %s238
      %p247 = scmp.eq.s32.totalorder %s33, 0
      %p248 = por %p246, %p247
      %p249 = scmp.ne.s32.totalorder %s237, %s238
      %p250 = scmp.eq.s32.totalorder %s34, 1
      %p251 = por %p249, %p250
      %p253 = scmp.ne.s32.totalorder %s238, %s252
      %p254 = scmp.eq.s32.totalorder %s34, 0
      %p255 = por %p253, %p254
      %s257 = sadd.s32 %s256, 1
      %p260 = scmp.eq.s32.totalorder %s28, 1
      %p261 = scmp.ne.s32.totalorder %s256, %s258
      %p262 = scmp.eq.s32.totalorder %s28, 0
      %p263 = por %p261, %p262
      %p264 = scmp.ne.s32.totalorder %s256, %s258
      %p265 = scmp.eq.s32.totalorder %s33, 1
      %p266 = por %p264, %p265
      %p267 = scmp.ne.s32.totalorder %s258, %s259
      %p268 = scmp.eq.s32.totalorder %s33, 0
      %p269 = por %p267, %p268
      %p270 = scmp.ne.s32.totalorder %s258, %s259
      %p271 = scmp.eq.s32.totalorder %s34, 1
      %p272 = por %p270, %p271
      %p274 = scmp.ne.s32.totalorder %s259, %s273
      %p275 = scmp.eq.s32.totalorder %s34, 0
      %p276 = por %p274, %p275
      %s278 = sadd.s32 %s277, 1
      %p281 = scmp.eq.s32.totalorder %s28, 1
      %p282 = scmp.ne.s32.totalorder %s277, %s279
      %p283 = scmp.eq.s32.totalorder %s28, 0
      %p284 = por %p282, %p283
      %p285 = scmp.ne.s32.totalorder %s277, %s279
      %p286 = scmp.eq.s32.totalorder %s33, 1
      %p287 = por %p285, %p286
      %p288 = scmp.ne.s32.totalorder %s279, %s280
      %p289 = scmp.eq.s32.totalorder %s33, 0
      %p290 = por %p288, %p289
      %p291 = scmp.ne.s32.totalorder %s279, %s280
      %p292 = scmp.eq.s32.totalorder %s34, 1
      %p293 = por %p291, %p292
      %p295 = scmp.ne.s32.totalorder %s280, %s294
      %p296 = scmp.eq.s32.totalorder %s34, 0
      %p297 = por %p295, %p296
      %s298 = ssub.s32 %s28, %s35
      %p299 = scmp.eq.s32.totalorder %s298, 0
      %s301 = sadd.s32 %s300, 1
      %s302 = scalar_select %p299, %s300, %s301
      %p305 = pneg %p299
      %p306 = scmp.eq.s32.totalorder %s28, 1
      %p307 = por %p305, %p306
      %p308 = scmp.ne.s32.totalorder %s300, %s303
      %p309 = scmp.eq.s32.totalorder %s28, 0
      %p310 = por %p308, %p309
      %p311 = scmp.ne.s32.totalorder %s300, %s303
      %p312 = scmp.eq.s32.totalorder %s33, 1
      %p313 = por %p311, %p312
      %p314 = scmp.ne.s32.totalorder %s303, %s304
      %p315 = scmp.eq.s32.totalorder %s33, 0
      %p316 = por %p314, %p315
      %p317 = scmp.ne.s32.totalorder %s303, %s304
      %p318 = scmp.eq.s32.totalorder %s34, 1
      %p319 = por %p317, %p318
      %p321 = scmp.ne.s32.totalorder %s304, %s320
      %p322 = scmp.eq.s32.totalorder %s34, 0
      %p323 = por %p321, %p322
      %p324 = scmp.le.s32.totalorder 1, %s28
      %p325 = scmp.lt.s32.totalorder %s28, 3
      %p326 = pnand %p324, %p325
      %p327 = pneg %p326
      // Predicated region
      $region9: #{tpu_custom_call.1} parent=5 // pred_check
        _
      $region10: #{tpu_custom_call.1} parent=5 // pred_check_branch
        %329 = sbr.rel (%p326) target = $region12
      $region11: #{tpu_custom_call.1} parent=5 // pred_region
        %s330 = ssub.s32 %s28, 1
        // Predicated region
        $region13: #{tpu_custom_call.1} parent=11 // pred_check
          %p331 = pneg %p101
        $region14: #{tpu_custom_call.1} parent=11 // pred_check_branch
          %333 = sbr.rel (%p331) target = $region16
        $region15: #{tpu_custom_call.1} parent=11 // pred_region
          _
        $region16: #{tpu_custom_call.1} parent=11 // pred_fallthru
          _
        // Predicated region
        $region17: #{tpu_custom_call.1} parent=11 // pred_check
          %p334 = pneg %p122
        $region18: #{tpu_custom_call.1} parent=11 // pred_check_branch
          %336 = sbr.rel (%p334) target = $region20
        $region19: #{tpu_custom_call.1} parent=11 // pred_region
          _
        $region20: #{tpu_custom_call.1} parent=11 // pred_fallthru
          _
        // Predicated region
        $region21: #{tpu_custom_call.1} parent=11 // pred_check
          %p337 = pneg %p143
        $region22: #{tpu_custom_call.1} parent=11 // pred_check_branch
          %339 = sbr.rel (%p337) target = $region24
        $region23: #{tpu_custom_call.1} parent=11 // pred_region
          _
        $region24: #{tpu_custom_call.1} parent=11 // pred_fallthru
          _
        // Predicated region
        $region25: #{tpu_custom_call.1} parent=11 // pred_check
          %p340 = pneg %p164
        $region26: #{tpu_custom_call.1} parent=11 // pred_check_branch
          %342 = sbr.rel (%p340) target = $region28
        $region27: #{tpu_custom_call.1} parent=11 // pred_region
          _
        $region28: #{tpu_custom_call.1} parent=11 // pred_fallthru
          _
        // Predicated region
        $region29: #{tpu_custom_call.1} parent=11 // pred_check
          %p343 = pneg %p185
        $region30: #{tpu_custom_call.1} parent=11 // pred_check_branch
          %345 = sbr.rel (%p343) target = $region32
        $region31: #{tpu_custom_call.1} parent=11 // pred_region
          _
        $region32: #{tpu_custom_call.1} parent=11 // pred_fallthru
          _
        // Predicated region
        $region33: #{tpu_custom_call.1} parent=11 // pred_check
          %p346 = pneg %p206
        $region34: #{tpu_custom_call.1} parent=11 // pred_check_branch
          %348 = sbr.rel (%p346) target = $region36
        $region35: #{tpu_custom_call.1} parent=11 // pred_region
          _
        $region36: #{tpu_custom_call.1} parent=11 // pred_fallthru
          _
        // Predicated region
        $region37: #{tpu_custom_call.1} parent=11 // pred_check
          %p349 = pneg %p227
        $region38: #{tpu_custom_call.1} parent=11 // pred_check_branch
          %351 = sbr.rel (%p349) target = $region40
        $region39: #{tpu_custom_call.1} parent=11 // pred_region
          _
        $region40: #{tpu_custom_call.1} parent=11 // pred_fallthru
          _
        // Predicated region
        $region41: #{tpu_custom_call.1} parent=11 // pred_check
          %p352 = pneg %p248
        $region42: #{tpu_custom_call.1} parent=11 // pred_check_branch
          %354 = sbr.rel (%p352) target = $region44
        $region43: #{tpu_custom_call.1} parent=11 // pred_region
          _
        $region44: #{tpu_custom_call.1} parent=11 // pred_fallthru
          _
        // Predicated region
        $region45: #{tpu_custom_call.1} parent=11 // pred_check
          %p355 = pneg %p269
        $region46: #{tpu_custom_call.1} parent=11 // pred_check_branch
          %357 = sbr.rel (%p355) target = $region48
        $region47: #{tpu_custom_call.1} parent=11 // pred_region
          _
        $region48: #{tpu_custom_call.1} parent=11 // pred_fallthru
          _
        // Predicated region
        $region49: #{tpu_custom_call.1} parent=11 // pred_check
          %p358 = pneg %p290
        $region50: #{tpu_custom_call.1} parent=11 // pred_check_branch
          %360 = sbr.rel (%p358) target = $region52
        $region51: #{tpu_custom_call.1} parent=11 // pred_region
          _
        $region52: #{tpu_custom_call.1} parent=11 // pred_fallthru
          _
      $region12: #{tpu_custom_call.1} parent=5 // pred_fallthru
        _
      %p361 = scmp.lt.s32.totalorder %s28, 2
      // Predicated region
      $region53: #{tpu_custom_call.1} parent=5 // pred_check
        %p362 = pneg %p361
      $region54: #{tpu_custom_call.1} parent=5 // pred_check_branch
        %364 = sbr.rel (%p362) target = $region56
      $region55: #{tpu_custom_call.1} parent=5 // pred_region
        // Predicated region
        $region57: #{tpu_custom_call.1} parent=55 // pred_check
          %p365 = pneg %p48
        $region58: #{tpu_custom_call.1} parent=55 // pred_check_branch
          %367 = sbr.rel (%p365) target = $region60
        $region59: #{tpu_custom_call.1} parent=55 // pred_region
          %s368 = sand.u32 %s38, 1
          %s369 = scalar_lea.sflag [#allocation4], %s368
          %s370 = sand.u32 %s38, 1
          %s371 = smul.addr %s370, 80
          %s372 = scalar_lea.vmem [#allocation3], %s371
          %s373 = smul.u32 4, %s28
          %s375 = ssub.s32 1280, 1280
          %376 = vsyncadd %s369, %s375
          %s377 = smul.addr %s373, 64
          %s378 = scalar_lea.hbm %s0, %s377
          %s379 = sshll.u32 %s372, 4
          %s380 = int_to_ptr.vmem [resolvable:$true] %s379
          %385 = dma.hbm_to_vmem [thread:$0]  %s378, 1280, %s380, %s369, 512, 256, 16
        $region60: #{tpu_custom_call.1} parent=55 // pred_fallthru
          _
        // Predicated region
        $region61: #{tpu_custom_call.1} parent=55 // pred_check
          %p386 = pneg %p74
        $region62: #{tpu_custom_call.1} parent=55 // pred_check_branch
          %388 = sbr.rel (%p386) target = $region64
        $region63: #{tpu_custom_call.1} parent=55 // pred_region
          %s389 = sand.u32 %s64, 1
          %s390 = scalar_lea.sflag [#allocation7], %s389
          %s391 = sand.u32 %s64, 1
          %s392 = smul.addr %s391, 80
          %s393 = scalar_lea.vmem [#allocation6], %s392
          %s394 = smul.u32 4, %s28
          %s396 = ssub.s32 1280, 1280
          %397 = vsyncadd %s390, %s396
          %s398 = smul.addr %s394, 64
          %s399 = scalar_lea.hbm %s1, %s398
          %s400 = sshll.u32 %s393, 4
          %s401 = int_to_ptr.vmem [resolvable:$true] %s400
          %406 = dma.hbm_to_vmem [thread:$0]  %s399, 1280, %s401, %s390, 512, 256, 16
        $region64: #{tpu_custom_call.1} parent=55 // pred_fallthru
          _
      $region56: #{tpu_custom_call.1} parent=5 // pred_fallthru
        _
      %p407 = scmp.le.s32.totalorder 1, %s28
      %p408 = scmp.lt.s32.totalorder %s28, 3
      %p409 = pnand %p407, %p408
      %p410 = pneg %p409
      // Predicated region
      $region65: #{tpu_custom_call.1} parent=5 // pred_check
        _
      $region66: #{tpu_custom_call.1} parent=5 // pred_check_branch
        %412 = sbr.rel (%p409) target = $region68
      $region67: #{tpu_custom_call.1} parent=5 // pred_region
        %s413 = ssub.s32 %s28, 1
        %s414 = sand.u32 %s41, 1
        %s415 = scalar_lea.sflag [#allocation4], %s414
        %s416 = sand.u32 %s41, 1
        %s417 = smul.addr %s416, 80
        %s418 = scalar_lea.vmem [#allocation3], %s417
        // Predicated region
        $region69: #{tpu_custom_call.1} parent=67 // pred_check
          %p419 = pneg %p54
        $region70: #{tpu_custom_call.1} parent=67 // pred_check_branch
          %421 = sbr.rel (%p419) target = $region72
        $region71: #{tpu_custom_call.1} parent=67 // pred_region
          %422 = dma.done %s415, 1280
        $region72: #{tpu_custom_call.1} parent=67 // pred_fallthru
          _
        %s423 = sand.u32 %s67, 1
        %s424 = scalar_lea.sflag [#allocation7], %s423
        %s425 = sand.u32 %s67, 1
        %s426 = smul.addr %s425, 80
        %s427 = scalar_lea.vmem [#allocation6], %s426
        // Predicated region
        $region73: #{tpu_custom_call.1} parent=67 // pred_check
          %p428 = pneg %p80
        $region74: #{tpu_custom_call.1} parent=67 // pred_check_branch
          %430 = sbr.rel (%p428) target = $region76
        $region75: #{tpu_custom_call.1} parent=67 // pred_region
          %431 = dma.done %s424, 1280
        $region76: #{tpu_custom_call.1} parent=67 // pred_fallthru
          _
        %s432 = sand.u32 %s41, 1
        %s433 = scalar_lea.sflag [#allocation4], %s432
        %s434 = sand.u32 %s41, 1
        %s435 = smul.addr %s434, 80
        %s436 = scalar_lea.vmem [#allocation3], %s435
        %p437 = pneg %p54
        %p438 = pneg %p51
        %s439 = sand.u32 %s67, 1
        %s440 = scalar_lea.sflag [#allocation7], %s439
        %s441 = sand.u32 %s67, 1
        %s442 = smul.addr %s441, 80
        %s443 = scalar_lea.vmem [#allocation6], %s442
        %p444 = pneg %p80
        %p445 = pneg %p77
        %p446 = pneg %p101
        %p447 = pneg %p98
        %p448 = pneg %p122
        %p449 = pneg %p119
        %p450 = pneg %p143
        %p451 = pneg %p140
        %p452 = pneg %p164
        %p453 = pneg %p161
        %p454 = pneg %p185
        %p455 = pneg %p182
        %p456 = pneg %p206
        %p457 = pneg %p203
        %p458 = pneg %p227
        %p459 = pneg %p224
        %p460 = pneg %p248
        %p461 = pneg %p245
        %p462 = pneg %p269
        %p463 = pneg %p266
        %p464 = pneg %p290
        %p465 = pneg %p287
        %p466 = pneg %p316
        %p467 = pneg %p313
        %s468 = sand.u32 %s303, 1
        %s469 = scalar_lea.sflag [#allocation5], %s468
        %s470 = sand.u32 %s303, 1
        %s471 = smul.addr %s470, 4
        %s472 = scalar_lea.vmem [#allocation8], %s471
        %s473 = smul.u32 4, %s33
        %s474 = smul.u32 4, %s33
        %s475 = smul.u32 4, %s33
        %v477 = vld [vmem:[%s418] sm:$0xff]
        %v478 = vld [vmem:[%s418 + $0x8] sm:$0xff]
        %v479 = vld [vmem:[%s418 + $0x10] sm:$0xff]
        %v480 = vld [vmem:[%s418 + $0x18] sm:$0xff]
        %v481 = vld [vmem:[%s418 + $0x20] sm:$0xff]
        %v482 = vld [vmem:[%s418 + $0x28] sm:$0xff]
        %v483 = vld [vmem:[%s418 + $0x30] sm:$0xff]
        %v484 = vld [vmem:[%s418 + $0x38] sm:$0xff]
        %v485 = vld [vmem:[%s418 + $0x40] sm:$0xff]
        %v486 = vld [vmem:[%s418 + $0x48] sm:$0xff]
        %v487 = vld [vmem:[%s427] sm:$0xff]
        %v488 = vld [vmem:[%s427 + $0x8] sm:$0xff]
        %v489 = vld [vmem:[%s427 + $0x10] sm:$0xff]
        %v490 = vld [vmem:[%s427 + $0x18] sm:$0xff]
        %v491 = vld [vmem:[%s427 + $0x20] sm:$0xff]
        %v492 = vld [vmem:[%s427 + $0x28] sm:$0xff]
        %v493 = vld [vmem:[%s427 + $0x30] sm:$0xff]
        %v494 = vld [vmem:[%s427 + $0x38] sm:$0xff]
        %v495 = vld [vmem:[%s427 + $0x40] sm:$0xff]
        %v496 = vld [vmem:[%s427 + $0x48] sm:$0xff]
        %v497 = vunpack.c.l.bf16 %v477
        %v498 = vunpack.c.h.bf16 %v477
        %v499 = vunpack.c.l.bf16 %v478
        %v500 = vunpack.c.h.bf16 %v478
        %v501 = vunpack.c.l.bf16 %v479
        %v502 = vunpack.c.h.bf16 %v479
        %v503 = vunpack.c.l.bf16 %v480
        %v504 = vunpack.c.h.bf16 %v480
        %v505 = vunpack.c.l.bf16 %v481
        %v506 = vunpack.c.h.bf16 %v481
        %v507 = vunpack.c.l.bf16 %v482
        %v508 = vunpack.c.h.bf16 %v482
        %v509 = vunpack.c.l.bf16 %v483
        %v510 = vunpack.c.h.bf16 %v483
        %v511 = vunpack.c.l.bf16 %v484
        %v512 = vunpack.c.h.bf16 %v484
        %v513 = vunpack.c.l.bf16 %v485
        %v514 = vunpack.c.h.bf16 %v485
        %v515 = vunpack.c.l.bf16 %v486
        %v516 = vunpack.c.h.bf16 %v486
        %v517 = vunpack.c.l.bf16 %v487
        %v518 = vunpack.c.h.bf16 %v487
        %v519 = vunpack.c.l.bf16 %v488
        %v520 = vunpack.c.h.bf16 %v488
        %v521 = vunpack.c.l.bf16 %v489
        %v522 = vunpack.c.h.bf16 %v489
        %v523 = vunpack.c.l.bf16 %v490
        %v524 = vunpack.c.h.bf16 %v490
        %v525 = vunpack.c.l.bf16 %v491
        %v526 = vunpack.c.h.bf16 %v491
        %v527 = vunpack.c.l.bf16 %v492
        %v528 = vunpack.c.h.bf16 %v492
        %v529 = vunpack.c.l.bf16 %v493
        %v530 = vunpack.c.h.bf16 %v493
        %v531 = vunpack.c.l.bf16 %v494
        %v532 = vunpack.c.h.bf16 %v494
        %v533 = vunpack.c.l.bf16 %v495
        %v534 = vunpack.c.h.bf16 %v495
        %v535 = vunpack.c.l.bf16 %v496
        %v536 = vunpack.c.h.bf16 %v496
        %v537 = vmul.f32 %v497, %v517
        %v538 = vmul.f32 %v498, %v518
        %v539 = vmul.f32 %v499, %v519
        %v540 = vmul.f32 %v500, %v520
        %v541 = vmul.f32 %v501, %v521
        %v542 = vmul.f32 %v502, %v522
        %v543 = vmul.f32 %v503, %v523
        %v544 = vmul.f32 %v504, %v524
        %v545 = vmul.f32 %v505, %v525
        %v546 = vmul.f32 %v506, %v526
        %v547 = vmul.f32 %v507, %v527
        %v548 = vmul.f32 %v508, %v528
        %v549 = vmul.f32 %v509, %v529
        %v550 = vmul.f32 %v510, %v530
        %v551 = vmul.f32 %v511, %v531
        %v552 = vmul.f32 %v512, %v532
        %v553 = vmul.f32 %v513, %v533
        %v554 = vmul.f32 %v514, %v534
        %v555 = vmul.f32 %v515, %v535
        %v556 = vmul.f32 %v516, %v536
        %v557 = vld [vmem:[%s2] sm:$0xf]
        %v558 = vld [vmem:[%s2 + $0x4] sm:$0xf]
        %v559 = vld [vmem:[%s2 + $0x8] sm:$0xf]
        %v560 = vld [vmem:[%s2 + $0xc] sm:$0xf]
        %v561 = vld [vmem:[%s3] sm:$0xf]
        %v562 = vld [vmem:[%s3 + $0x4] sm:$0xf]
        %v563 = vld [vmem:[%s3 + $0x8] sm:$0xf]
        %v564 = vld [vmem:[%s3 + $0xc] sm:$0xf]
        %v569 = vunpack.c.l.b16 %v561
        %v570 = vunpack.c.l.b16 %v562
        %v571 = vunpack.c.l.b16 %v563
        %v572 = vunpack.c.l.b16 %v564
        %v573 = vpack.c.b16 %v570, %v569
        %v574 = vpack.c.b16 %v572, %v571
        %v585 = vunpack.c.l.b16 %v487
        %v586 = vunpack.c.h.b16 %v487
        %v587 = vunpack.c.l.b16 %v488
        %v588 = vunpack.c.h.b16 %v488
        %v589 = vunpack.c.l.b16 %v489
        %v590 = vunpack.c.h.b16 %v489
        %v591 = vunpack.c.l.b16 %v490
        %v592 = vunpack.c.h.b16 %v490
        %v593 = vunpack.c.l.b16 %v491
        %v594 = vunpack.c.h.b16 %v491
        %v595 = vunpack.c.l.b16 %v492
        %v596 = vunpack.c.h.b16 %v492
        %v597 = vunpack.c.l.b16 %v493
        %v598 = vunpack.c.h.b16 %v493
        %v599 = vunpack.c.l.b16 %v494
        %v600 = vunpack.c.h.b16 %v494
        %v601 = vunpack.c.l.b16 %v495
        %v602 = vunpack.c.h.b16 %v495
        %v603 = vunpack.c.l.b16 %v496
        %v604 = vunpack.c.h.b16 %v496
        %v605 = vpack.c.b16 %v589, %v585
        %v606 = vpack.c.b16 %v590, %v586
        %v607 = vpack.c.b16 %v591, %v587
        %v608 = vpack.c.b16 %v592, %v588
        %v609 = vpack.c.b16 %v597, %v593
        %v610 = vpack.c.b16 %v598, %v594
        %v611 = vpack.c.b16 %v599, %v595
        %v612 = vpack.c.b16 %v600, %v596
        %v613 = vpack.c.b16 %v601, %v601
        %v614 = vpack.c.b16 %v602, %v602
        %v615 = vpack.c.b16 %v603, %v603
        %v616 = vpack.c.b16 %v604, %v604
        %vm625 = vcmask 326656
        %v627 = vsel %vm625, %v573, 0
        %v630 = vsel %vm625, %v574, 0
        %vm632 = vcmask 1043456
        %v634 = vsel %vm632, %v613, 0
        %v637 = vsel %vm632, %v614, 0
        %v640 = vsel %vm632, %v615, 0
        %v643 = vsel %vm632, %v616, 0
        %645 = vmatprep.subr.bf16.mxu0 0
        %646 = vmatpush1.bf16.msra.mxu0 0
        %647 = vmatprep.subr.bf16.mxu0 0
        %648 = vmatpush1.bf16.msra.mxu0 0
        %649 = vmatprep.subr.bf16.mxu0 0
        %650 = vmatpush1.bf16.msra.mxu0 0
        %651 = vmatprep.subr.bf16.mxu0 0
        %652 = vmatpush1.bf16.msra.mxu0 0
        %653 = vmatprep.subr.bf16.mxu0 0
        %654 = vmatpush1.bf16.msra.mxu0 0
        %655 = vmatprep.subr.bf16.mxu0 %v637
        %656 = vmatpush1.bf16.msra.mxu0 %v634
        %657 = vmatprep.subr.bf16.mxu0 %v610
        %658 = vmatpush1.bf16.msra.mxu0 %v609
        %659 = vmatprep.subr.bf16.mxu0 %v606
        %660 = vmatpush1.bf16.msra.mxu0 %v605
        %661 = vmatprep.subr.bf16.mxu0 0
        %662 = vmatpush2.bf16.msra.mxu0 0
        %663 = vmatprep.subr.bf16.mxu0 0
        %664 = vmatpush2.bf16.msra.mxu0 0
        %665 = vmatprep.subr.bf16.mxu0 0
        %666 = vmatpush2.bf16.msra.mxu0 0
        %667 = vmatprep.subr.bf16.mxu0 0
        %668 = vmatpush2.bf16.msra.mxu0 0
        %669 = vmatprep.subr.bf16.mxu0 0
        %670 = vmatpush2.bf16.msra.mxu0 0
        %671 = vmatprep.subr.bf16.mxu0 0
        %672 = vmatpush2.bf16.msra.mxu0 0
        %673 = vmatprep.subr.bf16.mxu0 0
        %674 = vmatpush2.bf16.msra.mxu0 0
        %675 = vmatprep.subr.bf16.mxu0 0
        %676 = vmatpush2.bf16.msra.mxu0 0
        %677 = vmatprep.mubr.bf16.mxu0 0
        %678 = vmatmul.mubr.bf16.gmra.mxu0 %v627
        %v679 = vpop.f32.mrf.mxu0
        %v680 = vadd.f32 0.0, %v679
        %v681 = vpop.f32.mrf.mxu0
        %v682 = vadd.f32 0.0, %v681
        %v683 = vpop.f32.mrf.mxu0
        %v684 = vadd.f32 0.0, %v683
        %v685 = vpop.f32.mrf.mxu0
        %v686 = vadd.f32 0.0, %v685
        %687 = vmatprep.mubr.bf16.mxu0 0
        %688 = vmatmul.mubr.bf16.gmra.mxu0 %v630
        %v689 = vpop.f32.mrf.mxu0
        %v690 = vadd.f32 0.0, %v689
        %v691 = vpop.f32.mrf.mxu0
        %v692 = vadd.f32 0.0, %v691
        %v693 = vpop.f32.mrf.mxu0
        %v694 = vadd.f32 0.0, %v693
        %v695 = vpop.f32.mrf.mxu0
        %v696 = vadd.f32 0.0, %v695
        %697 = vdwg.mxu0
        %698 = vmatprep.subr.bf16.mxu0 0
        %699 = vmatpush1.bf16.msra.mxu0 0
        %700 = vmatprep.subr.bf16.mxu0 0
        %701 = vmatpush1.bf16.msra.mxu0 0
        %702 = vmatprep.subr.bf16.mxu0 0
        %703 = vmatpush1.bf16.msra.mxu0 0
        %704 = vmatprep.subr.bf16.mxu0 0
        %705 = vmatpush1.bf16.msra.mxu0 0
        %706 = vmatprep.subr.bf16.mxu0 0
        %707 = vmatpush1.bf16.msra.mxu0 0
        %708 = vmatprep.subr.bf16.mxu0 %v643
        %709 = vmatpush1.bf16.msra.mxu0 %v640
        %710 = vmatprep.subr.bf16.mxu0 %v612
        %711 = vmatpush1.bf16.msra.mxu0 %v611
        %712 = vmatprep.subr.bf16.mxu0 %v608
        %713 = vmatpush1.bf16.msra.mxu0 %v607
        %714 = vmatprep.subr.bf16.mxu0 0
        %715 = vmatpush2.bf16.msra.mxu0 0
        %716 = vmatprep.subr.bf16.mxu0 0
        %717 = vmatpush2.bf16.msra.mxu0 0
        %718 = vmatprep.subr.bf16.mxu0 0
        %719 = vmatpush2.bf16.msra.mxu0 0
        %720 = vmatprep.subr.bf16.mxu0 0
        %721 = vmatpush2.bf16.msra.mxu0 0
        %722 = vmatprep.subr.bf16.mxu0 0
        %723 = vmatpush2.bf16.msra.mxu0 0
        %724 = vmatprep.subr.bf16.mxu0 0
        %725 = vmatpush2.bf16.msra.mxu0 0
        %726 = vmatprep.subr.bf16.mxu0 0
        %727 = vmatpush2.bf16.msra.mxu0 0
        %728 = vmatprep.subr.bf16.mxu0 0
        %729 = vmatpush2.bf16.msra.mxu0 0
        %730 = vmatprep.mubr.bf16.mxu0 0
        %731 = vmatmul.mubr.bf16.gmra.mxu0 %v627
        %v732 = vpop.f32.mrf.mxu0
        %v733 = vadd.f32 0.0, %v732
        %v734 = vpop.f32.mrf.mxu0
        %v735 = vadd.f32 0.0, %v734
        %v736 = vpop.f32.mrf.mxu0
        %v737 = vadd.f32 0.0, %v736
        %v738 = vpop.f32.mrf.mxu0
        %v739 = vadd.f32 0.0, %v738
        %740 = vmatprep.mubr.bf16.mxu0 0
        %741 = vmatmul.mubr.bf16.gmra.mxu0 %v630
        %v742 = vpop.f32.mrf.mxu0
        %v743 = vadd.f32 0.0, %v742
        %v744 = vpop.f32.mrf.mxu0
        %v745 = vadd.f32 0.0, %v744
        %v746 = vpop.f32.mrf.mxu0
        %v747 = vadd.f32 0.0, %v746
        %v748 = vpop.f32.mrf.mxu0
        %v749 = vadd.f32 0.0, %v748
        %750 = vdwg.mxu0
        %v755 = vunpack.c.l.b16 %v557
        %v756 = vunpack.c.l.b16 %v558
        %v757 = vunpack.c.l.b16 %v559
        %v758 = vunpack.c.l.b16 %v560
        %v759 = vpack.c.b16 %v756, %v755
        %v760 = vpack.c.b16 %v758, %v757
        %v771 = vunpack.c.l.b16 %v477
        %v772 = vunpack.c.h.b16 %v477
        %v773 = vunpack.c.l.b16 %v478
        %v774 = vunpack.c.h.b16 %v478
        %v775 = vunpack.c.l.b16 %v479
        %v776 = vunpack.c.h.b16 %v479
        %v777 = vunpack.c.l.b16 %v480
        %v778 = vunpack.c.h.b16 %v480
        %v779 = vunpack.c.l.b16 %v481
        %v780 = vunpack.c.h.b16 %v481
        %v781 = vunpack.c.l.b16 %v482
        %v782 = vunpack.c.h.b16 %v482
        %v783 = vunpack.c.l.b16 %v483
        %v784 = vunpack.c.h.b16 %v483
        %v785 = vunpack.c.l.b16 %v484
        %v786 = vunpack.c.h.b16 %v484
        %v787 = vunpack.c.l.b16 %v485
        %v788 = vunpack.c.h.b16 %v485
        %v789 = vunpack.c.l.b16 %v486
        %v790 = vunpack.c.h.b16 %v486
        %v791 = vpack.c.b16 %v775, %v771
        %v792 = vpack.c.b16 %v776, %v772
        %v793 = vpack.c.b16 %v777, %v773
        %v794 = vpack.c.b16 %v778, %v774
        %v795 = vpack.c.b16 %v783, %v779
        %v796 = vpack.c.b16 %v784, %v780
        %v797 = vpack.c.b16 %v785, %v781
        %v798 = vpack.c.b16 %v786, %v782
        %v799 = vpack.c.b16 %v787, %v787
        %v800 = vpack.c.b16 %v788, %v788
        %v801 = vpack.c.b16 %v789, %v789
        %v802 = vpack.c.b16 %v790, %v790
        %v812 = vsel %vm625, %v759, 0
        %v815 = vsel %vm625, %v760, 0
        %v818 = vsel %vm632, %v799, 0
        %v821 = vsel %vm632, %v800, 0
        %v824 = vsel %vm632, %v801, 0
        %v827 = vsel %vm632, %v802, 0
        %829 = vmatprep.subr.bf16.mxu0 0
        %830 = vmatpush1.bf16.msra.mxu0 0
        %831 = vmatprep.subr.bf16.mxu0 0
        %832 = vmatpush1.bf16.msra.mxu0 0
        %833 = vmatprep.subr.bf16.mxu0 0
        %834 = vmatpush1.bf16.msra.mxu0 0
        %835 = vmatprep.subr.bf16.mxu0 0
        %836 = vmatpush1.bf16.msra.mxu0 0
        %837 = vmatprep.subr.bf16.mxu0 0
        %838 = vmatpush1.bf16.msra.mxu0 0
        %839 = vmatprep.subr.bf16.mxu0 %v821
        %840 = vmatpush1.bf16.msra.mxu0 %v818
        %841 = vmatprep.subr.bf16.mxu0 %v796
        %842 = vmatpush1.bf16.msra.mxu0 %v795
        %843 = vmatprep.subr.bf16.mxu0 %v792
        %844 = vmatpush1.bf16.msra.mxu0 %v791
        %845 = vmatprep.subr.bf16.mxu0 0
        %846 = vmatpush2.bf16.msra.mxu0 0
        %847 = vmatprep.subr.bf16.mxu0 0
        %848 = vmatpush2.bf16.msra.mxu0 0
        %849 = vmatprep.subr.bf16.mxu0 0
        %850 = vmatpush2.bf16.msra.mxu0 0
        %851 = vmatprep.subr.bf16.mxu0 0
        %852 = vmatpush2.bf16.msra.mxu0 0
        %853 = vmatprep.subr.bf16.mxu0 0
        %854 = vmatpush2.bf16.msra.mxu0 0
        %855 = vmatprep.subr.bf16.mxu0 0
        %856 = vmatpush2.bf16.msra.mxu0 0
        %857 = vmatprep.subr.bf16.mxu0 0
        %858 = vmatpush2.bf16.msra.mxu0 0
        %859 = vmatprep.subr.bf16.mxu0 0
        %860 = vmatpush2.bf16.msra.mxu0 0
        %861 = vmatprep.mubr.bf16.mxu0 0
        %862 = vmatmul.mubr.bf16.gmra.mxu0 %v812
        %v863 = vpop.f32.mrf.mxu0
        %v864 = vadd.f32 %v680, %v863
        %v865 = vpop.f32.mrf.mxu0
        %v866 = vadd.f32 %v682, %v865
        %v867 = vpop.f32.mrf.mxu0
        %v868 = vadd.f32 %v684, %v867
        %v869 = vpop.f32.mrf.mxu0
        %v870 = vadd.f32 %v686, %v869
        %871 = vmatprep.mubr.bf16.mxu0 0
        %872 = vmatmul.mubr.bf16.gmra.mxu0 %v815
        %v873 = vpop.f32.mrf.mxu0
        %v874 = vadd.f32 %v690, %v873
        %v875 = vpop.f32.mrf.mxu0
        %v876 = vadd.f32 %v692, %v875
        %v877 = vpop.f32.mrf.mxu0
        %v878 = vadd.f32 %v694, %v877
        %v879 = vpop.f32.mrf.mxu0
        %v880 = vadd.f32 %v696, %v879
        %881 = vdwg.mxu0
        %882 = vmatprep.subr.bf16.mxu0 0
        %883 = vmatpush1.bf16.msra.mxu0 0
        %884 = vmatprep.subr.bf16.mxu0 0
        %885 = vmatpush1.bf16.msra.mxu0 0
        %886 = vmatprep.subr.bf16.mxu0 0
        %887 = vmatpush1.bf16.msra.mxu0 0
        %888 = vmatprep.subr.bf16.mxu0 0
        %889 = vmatpush1.bf16.msra.mxu0 0
        %890 = vmatprep.subr.bf16.mxu0 0
        %891 = vmatpush1.bf16.msra.mxu0 0
        %892 = vmatprep.subr.bf16.mxu0 %v827
        %893 = vmatpush1.bf16.msra.mxu0 %v824
        %894 = vmatprep.subr.bf16.mxu0 %v798
        %895 = vmatpush1.bf16.msra.mxu0 %v797
        %896 = vmatprep.subr.bf16.mxu0 %v794
        %897 = vmatpush1.bf16.msra.mxu0 %v793
        %898 = vmatprep.subr.bf16.mxu0 0
        %899 = vmatpush2.bf16.msra.mxu0 0
        %900 = vmatprep.subr.bf16.mxu0 0
        %901 = vmatpush2.bf16.msra.mxu0 0
        %902 = vmatprep.subr.bf16.mxu0 0
        %903 = vmatpush2.bf16.msra.mxu0 0
        %904 = vmatprep.subr.bf16.mxu0 0
        %905 = vmatpush2.bf16.msra.mxu0 0
        %906 = vmatprep.subr.bf16.mxu0 0
        %907 = vmatpush2.bf16.msra.mxu0 0
        %908 = vmatprep.subr.bf16.mxu0 0
        %909 = vmatpush2.bf16.msra.mxu0 0
        %910 = vmatprep.subr.bf16.mxu0 0
        %911 = vmatpush2.bf16.msra.mxu0 0
        %912 = vmatprep.subr.bf16.mxu0 0
        %913 = vmatpush2.bf16.msra.mxu0 0
        %914 = vmatprep.mubr.bf16.mxu0 0
        %915 = vmatmul.mubr.bf16.gmra.mxu0 %v812
        %v916 = vpop.f32.mrf.mxu0
        %v917 = vadd.f32 %v733, %v916
        %v918 = vpop.f32.mrf.mxu0
        %v919 = vadd.f32 %v735, %v918
        %v920 = vpop.f32.mrf.mxu0
        %v921 = vadd.f32 %v737, %v920
        %v922 = vpop.f32.mrf.mxu0
        %v923 = vadd.f32 %v739, %v922
        %924 = vmatprep.mubr.bf16.mxu0 0
        %925 = vmatmul.mubr.bf16.gmra.mxu0 %v815
        %v926 = vpop.f32.mrf.mxu0
        %v927 = vadd.f32 %v743, %v926
        %v928 = vpop.f32.mrf.mxu0
        %v929 = vadd.f32 %v745, %v928
        %v930 = vpop.f32.mrf.mxu0
        %v931 = vadd.f32 %v747, %v930
        %v932 = vpop.f32.mrf.mxu0
        %v933 = vadd.f32 %v749, %v932
        %934 = vdwg.mxu0
        %v935 = vld [vmem:[%s4] sm:$0xff]
        %v936 = vld [vmem:[%s4 + $0x8] sm:$0xff]
        %v937 = vld [vmem:[%s4 + $0x10] sm:$0xff]
        %v938 = vld [vmem:[%s4 + $0x18] sm:$0xff]
        %940 = vset.pattern.permute.xlu0 0
        %941 = vperm.xlu0 %940, %v935
        %v942 = vpop.permute.xlu0 %941
        %945 = vset.pattern.permute.xlu0 0
        %946 = vperm.xlu0 %945, %v936
        %v947 = vpop.permute.xlu0 %946
        %950 = vset.pattern.permute.xlu0 0
        %951 = vperm.xlu0 %950, %v937
        %v952 = vpop.permute.xlu0 %951
        %955 = vset.pattern.permute.xlu0 0
        %956 = vperm.xlu0 %955, %v938
        %v957 = vpop.permute.xlu0 %956
        %v959 = vadd.f32 %v864, %v942
        %v960 = vadd.f32 %v866, %v942
        %v961 = vadd.f32 %v917, %v942
        %v962 = vadd.f32 %v919, %v942
        %v963 = vadd.f32 %v868, %v947
        %v964 = vadd.f32 %v870, %v947
        %v965 = vadd.f32 %v921, %v947
        %v966 = vadd.f32 %v923, %v947
        %v967 = vadd.f32 %v874, %v952
        %v968 = vadd.f32 %v876, %v952
        %v969 = vadd.f32 %v927, %v952
        %v970 = vadd.f32 %v929, %v952
        %v971 = vadd.f32 %v878, %v957
        %v972 = vadd.f32 %v880, %v957
        %v973 = vadd.f32 %v931, %v957
        %v974 = vadd.f32 %v933, %v957
        %v975 = vmax.f32 %v959, 0.0
        %v976 = vmax.f32 %v960, 0.0
        %v977 = vmax.f32 %v961, 0.0
        %v978 = vmax.f32 %v962, 0.0
        %v979 = vmax.f32 %v963, 0.0
        %v980 = vmax.f32 %v964, 0.0
        %v981 = vmax.f32 %v965, 0.0
        %v982 = vmax.f32 %v966, 0.0
        %v983 = vmax.f32 %v967, 0.0
        %v984 = vmax.f32 %v968, 0.0
        %v985 = vmax.f32 %v969, 0.0
        %v986 = vmax.f32 %v970, 0.0
        %v987 = vmax.f32 %v971, 0.0
        %v988 = vmax.f32 %v972, 0.0
        %v989 = vmax.f32 %v973, 0.0
        %v990 = vmax.f32 %v974, 0.0
        %v991 = vld [vmem:[%s5] sm:$0xf]
        %v992 = vld [vmem:[%s5 + $0x4] sm:$0xf]
        %v993 = vpack.c.bf16 %v979, %v975
        %v994 = vpack.c.bf16 %v980, %v976
        %v995 = vpack.c.bf16 %v981, %v977
        %v996 = vpack.c.bf16 %v982, %v978
        %v997 = vpack.c.bf16 %v987, %v983
        %v998 = vpack.c.bf16 %v988, %v984
        %v999 = vpack.c.bf16 %v989, %v985
        %v1000 = vpack.c.bf16 %v990, %v986
        %v1001 = vld [vmem:[%s6] sm:$0xff]
        %v1002 = vld [vmem:[%s6 + $0x8] sm:$0xff]
        %1004 = vset.pattern.permute.xlu0 0
        %1005 = vperm.xlu0 %1004, %v1001
        %v1006 = vpop.permute.xlu0 %1005
        %1009 = vset.pattern.permute.xlu0 0
        %1010 = vperm.xlu0 %1009, %v1002
        %v1011 = vpop.permute.xlu0 %1010
        %v1015 = vunpack.c.l.b16 %v991
        %v1016 = vunpack.c.l.b16 %v992
        %v1017 = vpack.c.b16 %v1016, %v1015
        %vm1018 = vcmask 261120
        %v1020 = vsel %vm1018, %v1017, 0
        %1022 = vmatprep.subr.bf16.mxu0 0
        %1023 = vmatpush1.bf16.msra.mxu0 0
        %1024 = vmatprep.subr.bf16.mxu0 0
        %1025 = vmatpush1.bf16.msra.mxu0 0
        %1026 = vmatprep.subr.bf16.mxu0 0
        %1027 = vmatpush1.bf16.msra.mxu0 0
        %1028 = vmatprep.subr.bf16.mxu0 0
        %1029 = vmatpush1.bf16.msra.mxu0 0
        %1030 = vmatprep.subr.bf16.mxu0 0
        %1031 = vmatpush1.bf16.msra.mxu0 0
        %1032 = vmatprep.subr.bf16.mxu0 0
        %1033 = vmatpush1.bf16.msra.mxu0 0
        %1034 = vmatprep.subr.bf16.mxu0 %v998
        %1035 = vmatpush1.bf16.msra.mxu0 %v997
        %1036 = vmatprep.subr.bf16.mxu0 %v994
        %1037 = vmatpush1.bf16.msra.mxu0 %v993
        %1038 = vmatprep.subr.bf16.mxu0 0
        %1039 = vmatpush2.bf16.msra.mxu0 0
        %1040 = vmatprep.subr.bf16.mxu0 0
        %1041 = vmatpush2.bf16.msra.mxu0 0
        %1042 = vmatprep.subr.bf16.mxu0 0
        %1043 = vmatpush2.bf16.msra.mxu0 0
        %1044 = vmatprep.subr.bf16.mxu0 0
        %1045 = vmatpush2.bf16.msra.mxu0 0
        %1046 = vmatprep.subr.bf16.mxu0 0
        %1047 = vmatpush2.bf16.msra.mxu0 0
        %1048 = vmatprep.subr.bf16.mxu0 0
        %1049 = vmatpush2.bf16.msra.mxu0 0
        %1050 = vmatprep.subr.bf16.mxu0 0
        %1051 = vmatpush2.bf16.msra.mxu0 0
        %1052 = vmatprep.subr.bf16.mxu0 0
        %1053 = vmatpush2.bf16.msra.mxu0 0
        %1054 = vmatprep.mubr.bf16.mxu0 0
        %1055 = vmatmul.mubr.bf16.gmra.mxu0 %v1020
        %v1056 = vpop.f32.mrf.mxu0
        %v1057 = vadd.f32 %v1006, %v1056
        %v1058 = vpop.f32.mrf.mxu0
        %v1059 = vadd.f32 %v1006, %v1058
        %v1060 = vpop.f32.mrf.mxu0
        %v1061 = vadd.f32 %v1011, %v1060
        %v1062 = vpop.f32.mrf.mxu0
        %v1063 = vadd.f32 %v1011, %v1062
        %1064 = vdwg.mxu0
        %1065 = vmatprep.subr.bf16.mxu0 0
        %1066 = vmatpush1.bf16.msra.mxu0 0
        %1067 = vmatprep.subr.bf16.mxu0 0
        %1068 = vmatpush1.bf16.msra.mxu0 0
        %1069 = vmatprep.subr.bf16.mxu0 0
        %1070 = vmatpush1.bf16.msra.mxu0 0
        %1071 = vmatprep.subr.bf16.mxu0 0
        %1072 = vmatpush1.bf16.msra.mxu0 0
        %1073 = vmatprep.subr.bf16.mxu0 0
        %1074 = vmatpush1.bf16.msra.mxu0 0
        %1075 = vmatprep.subr.bf16.mxu0 0
        %1076 = vmatpush1.bf16.msra.mxu0 0
        %1077 = vmatprep.subr.bf16.mxu0 %v1000
        %1078 = vmatpush1.bf16.msra.mxu0 %v999
        %1079 = vmatprep.subr.bf16.mxu0 %v996
        %1080 = vmatpush1.bf16.msra.mxu0 %v995
        %1081 = vmatprep.subr.bf16.mxu0 0
        %1082 = vmatpush2.bf16.msra.mxu0 0
        %1083 = vmatprep.subr.bf16.mxu0 0
        %1084 = vmatpush2.bf16.msra.mxu0 0
        %1085 = vmatprep.subr.bf16.mxu0 0
        %1086 = vmatpush2.bf16.msra.mxu0 0
        %1087 = vmatprep.subr.bf16.mxu0 0
        %1088 = vmatpush2.bf16.msra.mxu0 0
        %1089 = vmatprep.subr.bf16.mxu0 0
        %1090 = vmatpush2.bf16.msra.mxu0 0
        %1091 = vmatprep.subr.bf16.mxu0 0
        %1092 = vmatpush2.bf16.msra.mxu0 0
        %1093 = vmatprep.subr.bf16.mxu0 0
        %1094 = vmatpush2.bf16.msra.mxu0 0
        %1095 = vmatprep.subr.bf16.mxu0 0
        %1096 = vmatpush2.bf16.msra.mxu0 0
        %1097 = vmatprep.mubr.bf16.mxu0 0
        %1098 = vmatmul.mubr.bf16.gmra.mxu0 %v1020
        %v1099 = vpop.f32.mrf.mxu0
        %v1100 = vadd.f32 %v1006, %v1099
        %v1101 = vpop.f32.mrf.mxu0
        %v1102 = vadd.f32 %v1006, %v1101
        %v1103 = vpop.f32.mrf.mxu0
        %v1104 = vadd.f32 %v1011, %v1103
        %v1105 = vpop.f32.mrf.mxu0
        %v1106 = vadd.f32 %v1011, %v1105
        %1107 = vdwg.mxu0
        %v1108 = vmax.f32 %v1057, 0.0
        %v1109 = vmax.f32 %v1059, 0.0
        %v1110 = vmax.f32 %v1100, 0.0
        %v1111 = vmax.f32 %v1102, 0.0
        %v1112 = vmax.f32 %v1061, 0.0
        %v1113 = vmax.f32 %v1063, 0.0
        %v1114 = vmax.f32 %v1104, 0.0
        %v1115 = vmax.f32 %v1106, 0.0
        %v1116 = vld [vmem:[%s7] sm:$0xf]
        %v1117 = vpack.c.bf16 %v1112, %v1108
        %v1118 = vpack.c.bf16 %v1113, %v1109
        %v1119 = vpack.c.bf16 %v1114, %v1110
        %v1120 = vpack.c.bf16 %v1115, %v1111
        %v1121 = vld [vmem:[%s8] sm:$0xff]
        %1123 = vset.pattern.permute.xlu0 0
        %1124 = vperm.xlu0 %1123, %v1121
        %v1125 = vpop.permute.xlu0 %1124
        %vm1127 = vcmask 130048
        %v1129 = vsel %vm1127, %v1116, 0
        %1131 = vmatprep.subr.bf16.mxu0 0
        %1132 = vmatpush1.bf16.msra.mxu0 0
        %1133 = vmatprep.subr.bf16.mxu0 0
        %1134 = vmatpush1.bf16.msra.mxu0 0
        %1135 = vmatprep.subr.bf16.mxu0 0
        %1136 = vmatpush1.bf16.msra.mxu0 0
        %1137 = vmatprep.subr.bf16.mxu0 0
        %1138 = vmatpush1.bf16.msra.mxu0 0
        %1139 = vmatprep.subr.bf16.mxu0 0
        %1140 = vmatpush1.bf16.msra.mxu0 0
        %1141 = vmatprep.subr.bf16.mxu0 0
        %1142 = vmatpush1.bf16.msra.mxu0 0
        %1143 = vmatprep.subr.bf16.mxu0 0
        %1144 = vmatpush1.bf16.msra.mxu0 0
        %1145 = vmatprep.subr.bf16.mxu0 %v1118
        %1146 = vmatpush1.bf16.msra.mxu0 %v1117
        %1147 = vmatprep.subr.bf16.mxu0 0
        %1148 = vmatpush2.bf16.msra.mxu0 0
        %1149 = vmatprep.subr.bf16.mxu0 0
        %1150 = vmatpush2.bf16.msra.mxu0 0
        %1151 = vmatprep.subr.bf16.mxu0 0
        %1152 = vmatpush2.bf16.msra.mxu0 0
        %1153 = vmatprep.subr.bf16.mxu0 0
        %1154 = vmatpush2.bf16.msra.mxu0 0
        %1155 = vmatprep.subr.bf16.mxu0 0
        %1156 = vmatpush2.bf16.msra.mxu0 0
        %1157 = vmatprep.subr.bf16.mxu0 0
        %1158 = vmatpush2.bf16.msra.mxu0 0
        %1159 = vmatprep.subr.bf16.mxu0 0
        %1160 = vmatpush2.bf16.msra.mxu0 0
        %1161 = vmatprep.subr.bf16.mxu0 0
        %1162 = vmatpush2.bf16.msra.mxu0 0
        %1163 = vmatprep.mubr.bf16.mxu0 0
        %1164 = vmatmul.mubr.bf16.gmra.mxu0 %v1129
        %v1165 = vpop.f32.mrf.mxu0
        %v1166 = vadd.f32 %v1125, %v1165
        %v1167 = vpop.f32.mrf.mxu0
        %v1168 = vadd.f32 %v1125, %v1167
        %v1169 = vpop.f32.mrf.mxu0
        %v1170 = vpop.f32.mrf.mxu0
        %1171 = vdwg.mxu0
        %1172 = vmatprep.subr.bf16.mxu0 0
        %1173 = vmatpush1.bf16.msra.mxu0 0
        %1174 = vmatprep.subr.bf16.mxu0 0
        %1175 = vmatpush1.bf16.msra.mxu0 0
        %1176 = vmatprep.subr.bf16.mxu0 0
        %1177 = vmatpush1.bf16.msra.mxu0 0
        %1178 = vmatprep.subr.bf16.mxu0 0
        %1179 = vmatpush1.bf16.msra.mxu0 0
        %1180 = vmatprep.subr.bf16.mxu0 0
        %1181 = vmatpush1.bf16.msra.mxu0 0
        %1182 = vmatprep.subr.bf16.mxu0 0
        %1183 = vmatpush1.bf16.msra.mxu0 0
        %1184 = vmatprep.subr.bf16.mxu0 0
        %1185 = vmatpush1.bf16.msra.mxu0 0
        %1186 = vmatprep.subr.bf16.mxu0 %v1120
        %1187 = vmatpush1.bf16.msra.mxu0 %v1119
        %1188 = vmatprep.subr.bf16.mxu0 0
        %1189 = vmatpush2.bf16.msra.mxu0 0
        %1190 = vmatprep.subr.bf16.mxu0 0
        %1191 = vmatpush2.bf16.msra.mxu0 0
        %1192 = vmatprep.subr.bf16.mxu0 0
        %1193 = vmatpush2.bf16.msra.mxu0 0
        %1194 = vmatprep.subr.bf16.mxu0 0
        %1195 = vmatpush2.bf16.msra.mxu0 0
        %1196 = vmatprep.subr.bf16.mxu0 0
        %1197 = vmatpush2.bf16.msra.mxu0 0
        %1198 = vmatprep.subr.bf16.mxu0 0
        %1199 = vmatpush2.bf16.msra.mxu0 0
        %1200 = vmatprep.subr.bf16.mxu0 0
        %1201 = vmatpush2.bf16.msra.mxu0 0
        %1202 = vmatprep.subr.bf16.mxu0 0
        %1203 = vmatpush2.bf16.msra.mxu0 0
        %1204 = vmatprep.mubr.bf16.mxu0 0
        %1205 = vmatmul.mubr.bf16.gmra.mxu0 %v1129
        %v1206 = vpop.f32.mrf.mxu0
        %v1207 = vadd.f32 %v1125, %v1206
        %v1208 = vpop.f32.mrf.mxu0
        %v1209 = vadd.f32 %v1125, %v1208
        %v1210 = vpop.f32.mrf.mxu0
        %v1211 = vpop.f32.mrf.mxu0
        %1212 = vdwg.mxu0
        %v1213 = vmax.f32 %v1166, 0.0
        %v1214 = vmax.f32 %v1168, 0.0
        %v1215 = vmax.f32 %v1207, 0.0
        %v1216 = vmax.f32 %v1209, 0.0
        %v1217 = vld [vmem:[%s9] sm:$0x1]
        %v1218 = vld [vmem:[%s10] sm:$0x1]
        %v1220 = vsel %vm625, %v1218, 0
        %1222 = vmatprep.subr.mxu0 0.0
        %1223 = vmatpush1.msra.mxu0 0.0
        %1224 = vmatprep.subr.mxu0 0.0
        %1225 = vmatpush1.msra.mxu0 0.0
        %1226 = vmatprep.subr.mxu0 0.0
        %1227 = vmatpush1.msra.mxu0 0.0
        %1228 = vmatprep.subr.mxu0 0.0
        %1229 = vmatpush1.msra.mxu0 0.0
        %1230 = vmatprep.subr.mxu0 0.0
        %1231 = vmatpush1.msra.mxu0 0.0
        %1232 = vmatprep.subr.mxu0 0.0
        %1233 = vmatpush1.msra.mxu0 0.0
        %1234 = vmatprep.subr.mxu0 0.0
        %1235 = vmatpush1.msra.mxu0 0.0
        %1236 = vmatprep.subr.mxu0 0.0
        %1237 = vmatpush1.msra.mxu0 0.0
        %1238 = vmatprep.subr.mxu0 0.0
        %1239 = vmatpush1.msra.mxu0 0.0
        %1240 = vmatprep.subr.mxu0 0.0
        %1241 = vmatpush1.msra.mxu0 0.0
        %1242 = vmatprep.subr.mxu0 0.0
        %1243 = vmatpush1.msra.mxu0 0.0
        %1244 = vmatprep.subr.mxu0 %v554
        %1245 = vmatpush1.msra.mxu0 %v553
        %1246 = vmatprep.subr.mxu0 %v550
        %1247 = vmatpush1.msra.mxu0 %v549
        %1248 = vmatprep.subr.mxu0 %v546
        %1249 = vmatpush1.msra.mxu0 %v545
        %1250 = vmatprep.subr.mxu0 %v542
        %1251 = vmatpush1.msra.mxu0 %v541
        %1252 = vmatprep.subr.mxu0 %v538
        %1253 = vmatpush1.msra.mxu0 %v537
        %1254 = vmatprep.subr.mxu0 0.0
        %1255 = vmatpush2.msra.mxu0 0.0
        %1256 = vmatprep.subr.mxu0 0.0
        %1257 = vmatpush2.msra.mxu0 0.0
        %1258 = vmatprep.subr.mxu0 0.0
        %1259 = vmatpush2.msra.mxu0 0.0
        %1260 = vmatprep.subr.mxu0 0.0
        %1261 = vmatpush2.msra.mxu0 0.0
        %1262 = vmatprep.subr.mxu0 0.0
        %1263 = vmatpush2.msra.mxu0 0.0
        %1264 = vmatprep.subr.mxu0 0.0
        %1265 = vmatpush2.msra.mxu0 0.0
        %1266 = vmatprep.subr.mxu0 0.0
        %1267 = vmatpush2.msra.mxu0 0.0
        %1268 = vmatprep.subr.mxu0 0.0
        %1269 = vmatpush2.msra.mxu0 0.0
        %1270 = vmatprep.subr.mxu0 0.0
        %1271 = vmatpush2.msra.mxu0 0.0
        %1272 = vmatprep.subr.mxu0 0.0
        %1273 = vmatpush2.msra.mxu0 0.0
        %1274 = vmatprep.subr.mxu0 0.0
        %1275 = vmatpush2.msra.mxu0 0.0
        %1276 = vmatprep.subr.mxu0 0.0
        %1277 = vmatpush2.msra.mxu0 0.0
        %1278 = vmatprep.subr.mxu0 0.0
        %1279 = vmatpush2.msra.mxu0 0.0
        %1280 = vmatprep.subr.mxu0 0.0
        %1281 = vmatpush2.msra.mxu0 0.0
        %1282 = vmatprep.subr.mxu0 0.0
        %1283 = vmatpush2.msra.mxu0 0.0
        %1284 = vmatprep.subr.mxu0 0.0
        %1285 = vmatpush2.msra.mxu0 0.0
        %1286 = vmatprep.mubr.f32.mxu0 0.0
        %1287 = vmatmul.mubr.f32.gmra.mxu0 %v1220
        %v1288 = vpop.f32.mrf.mxu0
        %v1289 = vadd.f32 0.0, %v1288
        %v1290 = vpop.f32.mrf.mxu0
        %v1291 = vadd.f32 0.0, %v1290
        %1292 = vdwg.mxu0
        %1293 = vmatprep.subr.mxu0 0.0
        %1294 = vmatpush1.msra.mxu0 0.0
        %1295 = vmatprep.subr.mxu0 0.0
        %1296 = vmatpush1.msra.mxu0 0.0
        %1297 = vmatprep.subr.mxu0 0.0
        %1298 = vmatpush1.msra.mxu0 0.0
        %1299 = vmatprep.subr.mxu0 0.0
        %1300 = vmatpush1.msra.mxu0 0.0
        %1301 = vmatprep.subr.mxu0 0.0
        %1302 = vmatpush1.msra.mxu0 0.0
        %1303 = vmatprep.subr.mxu0 0.0
        %1304 = vmatpush1.msra.mxu0 0.0
        %1305 = vmatprep.subr.mxu0 0.0
        %1306 = vmatpush1.msra.mxu0 0.0
        %1307 = vmatprep.subr.mxu0 0.0
        %1308 = vmatpush1.msra.mxu0 0.0
        %1309 = vmatprep.subr.mxu0 0.0
        %1310 = vmatpush1.msra.mxu0 0.0
        %1311 = vmatprep.subr.mxu0 0.0
        %1312 = vmatpush1.msra.mxu0 0.0
        %1313 = vmatprep.subr.mxu0 0.0
        %1314 = vmatpush1.msra.mxu0 0.0
        %1315 = vmatprep.subr.mxu0 %v556
        %1316 = vmatpush1.msra.mxu0 %v555
        %1317 = vmatprep.subr.mxu0 %v552
        %1318 = vmatpush1.msra.mxu0 %v551
        %1319 = vmatprep.subr.mxu0 %v548
        %1320 = vmatpush1.msra.mxu0 %v547
        %1321 = vmatprep.subr.mxu0 %v544
        %1322 = vmatpush1.msra.mxu0 %v543
        %1323 = vmatprep.subr.mxu0 %v540
        %1324 = vmatpush1.msra.mxu0 %v539
        %1325 = vmatprep.subr.mxu0 0.0
        %1326 = vmatpush2.msra.mxu0 0.0
        %1327 = vmatprep.subr.mxu0 0.0
        %1328 = vmatpush2.msra.mxu0 0.0
        %1329 = vmatprep.subr.mxu0 0.0
        %1330 = vmatpush2.msra.mxu0 0.0
        %1331 = vmatprep.subr.mxu0 0.0
        %1332 = vmatpush2.msra.mxu0 0.0
        %1333 = vmatprep.subr.mxu0 0.0
        %1334 = vmatpush2.msra.mxu0 0.0
        %1335 = vmatprep.subr.mxu0 0.0
        %1336 = vmatpush2.msra.mxu0 0.0
        %1337 = vmatprep.subr.mxu0 0.0
        %1338 = vmatpush2.msra.mxu0 0.0
        %1339 = vmatprep.subr.mxu0 0.0
        %1340 = vmatpush2.msra.mxu0 0.0
        %1341 = vmatprep.subr.mxu0 0.0
        %1342 = vmatpush2.msra.mxu0 0.0
        %1343 = vmatprep.subr.mxu0 0.0
        %1344 = vmatpush2.msra.mxu0 0.0
        %1345 = vmatprep.subr.mxu0 0.0
        %1346 = vmatpush2.msra.mxu0 0.0
        %1347 = vmatprep.subr.mxu0 0.0
        %1348 = vmatpush2.msra.mxu0 0.0
        %1349 = vmatprep.subr.mxu0 0.0
        %1350 = vmatpush2.msra.mxu0 0.0
        %1351 = vmatprep.subr.mxu0 0.0
        %1352 = vmatpush2.msra.mxu0 0.0
        %1353 = vmatprep.subr.mxu0 0.0
        %1354 = vmatpush2.msra.mxu0 0.0
        %1355 = vmatprep.subr.mxu0 0.0
        %1356 = vmatpush2.msra.mxu0 0.0
        %1357 = vmatprep.mubr.f32.mxu0 0.0
        %1358 = vmatmul.mubr.f32.gmra.mxu0 %v1220
        %v1359 = vpop.f32.mrf.mxu0
        %v1360 = vadd.f32 0.0, %v1359
        %v1361 = vpop.f32.mrf.mxu0
        %v1362 = vadd.f32 0.0, %v1361
        %1363 = vdwg.mxu0
        %vm1364 = vcmask 64512
        %v1366 = vsel %vm1364, %v1217, 0
        %1368 = vmatprep.subr.mxu0 0.0
        %1369 = vmatpush1.msra.mxu0 0.0
        %1370 = vmatprep.subr.mxu0 0.0
        %1371 = vmatpush1.msra.mxu0 0.0
        %1372 = vmatprep.subr.mxu0 0.0
        %1373 = vmatpush1.msra.mxu0 0.0
        %1374 = vmatprep.subr.mxu0 0.0
        %1375 = vmatpush1.msra.mxu0 0.0
        %1376 = vmatprep.subr.mxu0 0.0
        %1377 = vmatpush1.msra.mxu0 0.0
        %1378 = vmatprep.subr.mxu0 0.0
        %1379 = vmatpush1.msra.mxu0 0.0
        %1380 = vmatprep.subr.mxu0 0.0
        %1381 = vmatpush1.msra.mxu0 0.0
        %1382 = vmatprep.subr.mxu0 0.0
        %1383 = vmatpush1.msra.mxu0 0.0
        %1384 = vmatprep.subr.mxu0 0.0
        %1385 = vmatpush1.msra.mxu0 0.0
        %1386 = vmatprep.subr.mxu0 0.0
        %1387 = vmatpush1.msra.mxu0 0.0
        %1388 = vmatprep.subr.mxu0 0.0
        %1389 = vmatpush1.msra.mxu0 0.0
        %1390 = vmatprep.subr.mxu0 0.0
        %1391 = vmatpush1.msra.mxu0 0.0
        %1392 = vmatprep.subr.mxu0 0.0
        %1393 = vmatpush1.msra.mxu0 0.0
        %1394 = vmatprep.subr.mxu0 0.0
        %1395 = vmatpush1.msra.mxu0 0.0
        %1396 = vmatprep.subr.mxu0 0.0
        %1397 = vmatpush1.msra.mxu0 0.0
        %1398 = vmatprep.subr.mxu0 %v1214
        %1399 = vmatpush1.msra.mxu0 %v1213
        %1400 = vmatprep.subr.mxu0 0.0
        %1401 = vmatpush2.msra.mxu0 0.0
        %1402 = vmatprep.subr.mxu0 0.0
        %1403 = vmatpush2.msra.mxu0 0.0
        %1404 = vmatprep.subr.mxu0 0.0
        %1405 = vmatpush2.msra.mxu0 0.0
        %1406 = vmatprep.subr.mxu0 0.0
        %1407 = vmatpush2.msra.mxu0 0.0
        %1408 = vmatprep.subr.mxu0 0.0
        %1409 = vmatpush2.msra.mxu0 0.0
        %1410 = vmatprep.subr.mxu0 0.0
        %1411 = vmatpush2.msra.mxu0 0.0
        %1412 = vmatprep.subr.mxu0 0.0
        %1413 = vmatpush2.msra.mxu0 0.0
        %1414 = vmatprep.subr.mxu0 0.0
        %1415 = vmatpush2.msra.mxu0 0.0
        %1416 = vmatprep.subr.mxu0 0.0
        %1417 = vmatpush2.msra.mxu0 0.0
        %1418 = vmatprep.subr.mxu0 0.0
        %1419 = vmatpush2.msra.mxu0 0.0
        %1420 = vmatprep.subr.mxu0 0.0
        %1421 = vmatpush2.msra.mxu0 0.0
        %1422 = vmatprep.subr.mxu0 0.0
        %1423 = vmatpush2.msra.mxu0 0.0
        %1424 = vmatprep.subr.mxu0 0.0
        %1425 = vmatpush2.msra.mxu0 0.0
        %1426 = vmatprep.subr.mxu0 0.0
        %1427 = vmatpush2.msra.mxu0 0.0
        %1428 = vmatprep.subr.mxu0 0.0
        %1429 = vmatpush2.msra.mxu0 0.0
        %1430 = vmatprep.subr.mxu0 0.0
        %1431 = vmatpush2.msra.mxu0 0.0
        %1432 = vmatprep.mubr.f32.mxu0 0.0
        %1433 = vmatmul.mubr.f32.gmra.mxu0 %v1366
        %v1434 = vpop.f32.mrf.mxu0
        %v1435 = vadd.f32 %v1289, %v1434
        %v1436 = vpop.f32.mrf.mxu0
        %v1437 = vadd.f32 %v1291, %v1436
        %1438 = vdwg.mxu0
        %1439 = vmatprep.subr.mxu0 0.0
        %1440 = vmatpush1.msra.mxu0 0.0
        %1441 = vmatprep.subr.mxu0 0.0
        %1442 = vmatpush1.msra.mxu0 0.0
        %1443 = vmatprep.subr.mxu0 0.0
        %1444 = vmatpush1.msra.mxu0 0.0
        %1445 = vmatprep.subr.mxu0 0.0
        %1446 = vmatpush1.msra.mxu0 0.0
        %1447 = vmatprep.subr.mxu0 0.0
        %1448 = vmatpush1.msra.mxu0 0.0
        %1449 = vmatprep.subr.mxu0 0.0
        %1450 = vmatpush1.msra.mxu0 0.0
        %1451 = vmatprep.subr.mxu0 0.0
        %1452 = vmatpush1.msra.mxu0 0.0
        %1453 = vmatprep.subr.mxu0 0.0
        %1454 = vmatpush1.msra.mxu0 0.0
        %1455 = vmatprep.subr.mxu0 0.0
        %1456 = vmatpush1.msra.mxu0 0.0
        %1457 = vmatprep.subr.mxu0 0.0
        %1458 = vmatpush1.msra.mxu0 0.0
        %1459 = vmatprep.subr.mxu0 0.0
        %1460 = vmatpush1.msra.mxu0 0.0
        %1461 = vmatprep.subr.mxu0 0.0
        %1462 = vmatpush1.msra.mxu0 0.0
        %1463 = vmatprep.subr.mxu0 0.0
        %1464 = vmatpush1.msra.mxu0 0.0
        %1465 = vmatprep.subr.mxu0 0.0
        %1466 = vmatpush1.msra.mxu0 0.0
        %1467 = vmatprep.subr.mxu0 0.0
        %1468 = vmatpush1.msra.mxu0 0.0
        %1469 = vmatprep.subr.mxu0 %v1216
        %1470 = vmatpush1.msra.mxu0 %v1215
        %1471 = vmatprep.subr.mxu0 0.0
        %1472 = vmatpush2.msra.mxu0 0.0
        %1473 = vmatprep.subr.mxu0 0.0
        %1474 = vmatpush2.msra.mxu0 0.0
        %1475 = vmatprep.subr.mxu0 0.0
        %1476 = vmatpush2.msra.mxu0 0.0
        %1477 = vmatprep.subr.mxu0 0.0
        %1478 = vmatpush2.msra.mxu0 0.0
        %1479 = vmatprep.subr.mxu0 0.0
        %1480 = vmatpush2.msra.mxu0 0.0
        %1481 = vmatprep.subr.mxu0 0.0
        %1482 = vmatpush2.msra.mxu0 0.0
        %1483 = vmatprep.subr.mxu0 0.0
        %1484 = vmatpush2.msra.mxu0 0.0
        %1485 = vmatprep.subr.mxu0 0.0
        %1486 = vmatpush2.msra.mxu0 0.0
        %1487 = vmatprep.subr.mxu0 0.0
        %1488 = vmatpush2.msra.mxu0 0.0
        %1489 = vmatprep.subr.mxu0 0.0
        %1490 = vmatpush2.msra.mxu0 0.0
        %1491 = vmatprep.subr.mxu0 0.0
        %1492 = vmatpush2.msra.mxu0 0.0
        %1493 = vmatprep.subr.mxu0 0.0
        %1494 = vmatpush2.msra.mxu0 0.0
        %1495 = vmatprep.subr.mxu0 0.0
        %1496 = vmatpush2.msra.mxu0 0.0
        %1497 = vmatprep.subr.mxu0 0.0
        %1498 = vmatpush2.msra.mxu0 0.0
        %1499 = vmatprep.subr.mxu0 0.0
        %1500 = vmatpush2.msra.mxu0 0.0
        %1501 = vmatprep.subr.mxu0 0.0
        %1502 = vmatpush2.msra.mxu0 0.0
        %1503 = vmatprep.mubr.f32.mxu0 0.0
        %1504 = vmatmul.mubr.f32.gmra.mxu0 %v1366
        %v1505 = vpop.f32.mrf.mxu0
        %v1506 = vadd.f32 %v1360, %v1505
        %v1507 = vpop.f32.mrf.mxu0
        %v1508 = vadd.f32 %v1362, %v1507
        %1509 = vdwg.mxu0
        %s1510 = sld [smem:[#allocation2]]
        %v1511 = vstv %s1510
        %v1512 = vadd.f32 %v1435, %v1511
        %v1513 = vadd.f32 %v1437, %v1511
        %v1514 = vadd.f32 %v1506, %v1511
        %v1515 = vadd.f32 %v1508, %v1511
        %v1516 = vxor.u32 %v1512, 2147483648
        %v1517 = vxor.u32 %v1513, 2147483648
        %v1518 = vxor.u32 %v1514, 2147483648
        %v1519 = vxor.u32 %v1515, 2147483648
        %v1520 = vmul.f32 %v1516, 1.442695
        %v1521 = vpow.pop %v1520
        %v1522 = vmul.f32 %v1517, 1.442695
        %v1523 = vpow.pop %v1522
        %v1524 = vmul.f32 %v1518, 1.442695
        %v1525 = vpow.pop %v1524
        %v1526 = vmul.f32 %v1519, 1.442695
        %v1527 = vpow.pop %v1526
        %v1528 = vadd.f32 %v1521, 1.0
        %v1529 = vadd.f32 %v1523, 1.0
        %v1530 = vadd.f32 %v1525, 1.0
        %v1531 = vadd.f32 %v1527, 1.0
        %v1532 = vrcp.pop %v1528
        %v1533 = vmul.f32 1.0, %v1532
        %v1534 = vrcp.pop %v1529
        %v1535 = vmul.f32 1.0, %v1534
        %v1536 = vrcp.pop %v1530
        %v1537 = vmul.f32 1.0, %v1536
        %v1538 = vrcp.pop %v1531
        %v1539 = vmul.f32 1.0, %v1538
        %v1544 = vcombine.low %v1533, %v1535
        %v1545 = vcombine.low %v1537, %v1539
        %v1547 = vunpack.c.l.s4 1966171168
        %v1548 = vunpack.c.0.s8 %v1547
        %v1549 = vlaneseq
        %v1550 = vshrl.u32 %v1549, 7
        %v1551 = vsub.s32 %v1548, %v1550
        %v1552 = vrot.slane %v1544, %v1551
        %v1554 = vunpack.c.l.s4 1966171168
        %v1555 = vunpack.c.0.s8 %v1554
        %v1556 = vlaneseq
        %v1557 = vshrl.u32 %v1556, 7
        %v1558 = vsub.s32 %v1555, %v1557
        %v1559 = vrot.slane %v1545, %v1558
        %v1560 = vcombine.low %v1552, %v1559
        %v1562 = vunpack.c.l.s4 1966171168
        %v1563 = vunpack.c.0.s8 %v1562
        %v1564 = vlaneseq
        %v1565 = vshrl.u32 %v1564, 7
        %v1566 = vsub.s32 %v1563, %v1565
        %v1567 = vrot.slane %v1560, %v1566
        %v1569 = vlaneseq
        %vm1570 = vcmp.ge.s32.totalorder %v1569, 0
        %vm1571 = vcmp.lt.s32.totalorder %v1569, 512
        %vm1572 = vmand %vm1570, %vm1571
        %1573 = vst.msk [vmem:[%s472] sm:$0xf] %vm1572, %v1567
        %s1574 = sand.u32 %s303, 1
        %s1575 = scalar_lea.sflag [#allocation5], %s1574
        %s1576 = sand.u32 %s303, 1
        %s1577 = smul.addr %s1576, 4
        %s1578 = scalar_lea.vmem [#allocation8], %s1577
        // Predicated region
        $region77: #{tpu_custom_call.1} parent=67 // pred_check
          %p1579 = pneg %p313
        $region78: #{tpu_custom_call.1} parent=67 // pred_check_branch
          %1581 = sbr.rel (%p1579) target = $region80
        $region79: #{tpu_custom_call.1} parent=67 // pred_region
          %s1582 = smul.u32 4, %s33
          %s1584 = ssub.s32 64, 64
          %1585 = vsyncadd %s1575, %s1584
          %s1586 = smul.addr %s1582, 16
          %s1587 = scalar_lea.hbm %s12, %s1586
          %s1589 = sshll.u32 %s1578, 4
          %s1590 = int_to_ptr.vmem [resolvable:$true] %s1589
          %1592 = dma.vmem_to_hbm [thread:$0]  %s1590, 64, %s1587, %s1575
        $region80: #{tpu_custom_call.1} parent=67 // pred_fallthru
          _
      $region68: #{tpu_custom_call.1} parent=5 // pred_fallthru
        _
      %p1593 = scmp.le.s32.totalorder 2, %s28
      // Predicated region
      $region81: #{tpu_custom_call.1} parent=5 // pred_check
        %p1594 = pneg %p1593
      $region82: #{tpu_custom_call.1} parent=5 // pred_check_branch
        %1596 = sbr.rel (%p1594) target = $region84
      $region83: #{tpu_custom_call.1} parent=5 // pred_region
        %s1597 = ssub.s32 %s28, 2
        // Predicated region
        $region85: #{tpu_custom_call.1} parent=83 // pred_check
          %p1598 = pneg %p319
        $region86: #{tpu_custom_call.1} parent=83 // pred_check_branch
          %1600 = sbr.rel (%p1598) target = $region88
        $region87: #{tpu_custom_call.1} parent=83 // pred_region
          %s1601 = sand.u32 %s304, 1
          %s1602 = scalar_lea.sflag [#allocation5], %s1601
          %s1603 = sand.u32 %s304, 1
          %s1604 = smul.addr %s1603, 4
          %s1605 = scalar_lea.vmem [#allocation8], %s1604
          %1606 = dma.done %s1602, 64
        $region88: #{tpu_custom_call.1} parent=83 // pred_fallthru
          _
      $region84: #{tpu_custom_call.1} parent=5 // pred_fallthru
        _
    $region6: #{tpu_custom_call.1} parent=1 // loop_footer
      %s32 = sadd.s32 1, %s28
    $region7: #{tpu_custom_call.1} parent=1 // loop_footer_branch
      %27 = sbr.rel target = $region3
    $region8: #{tpu_custom_call.1} parent=1 // loop_exit
      _
    %1607 = vsyncpa [#allocation4], 1
    %s1608 = scalar_lea.sflag [#allocation4], 1
    %1609 = vsyncpa %s1608, 1
    %1610 = vsyncpa [#allocation7], 1
    %s1611 = scalar_lea.sflag [#allocation7], 1
    %1612 = vsyncpa %s1611, 1
    %1613 = vsyncpa [#allocation5], 1
    %s1614 = scalar_lea.sflag [#allocation5], 1
    %1615 = vsyncpa %s1614, 1

</llo_original>
